<compile_context>
chip_gen: v7x
topology: tpu7x:2x2x1
jax: 0.10.0
libtpu: 0.0.40
codegen_flags: <defaults>
</compile_context>

<pallas_src>
import functools

import numpy as np
import jax
import jax.numpy as jnp
from jax import lax
from jax.experimental import pallas as pl
from jax.experimental.pallas import tpu as pltpu


_MIN_GRID_STEPS = 4            # keep the pipeline / both v7x TCs busy
_VMEM_HEADROOM = 4 * 1024 * 1024
_PACK_CIN_MAX = 256            # pack taps along K when Cin is below this


def _pair(v):
    if isinstance(v, (tuple, list)):
        return (int(v[0]), int(v[1]))
    return (int(v), int(v))


def _round_up(x, m):
    return (x + m - 1) // m * m


def _cdiv(a, b):
    return (a + b - 1) // b


@functools.lru_cache(maxsize=1)
def _vmem_limit_bytes():
    """Scoped-VMEM limit derived from the device generation.

    v5e/v6e (128 MiB physical) -> 96 MiB, v7x (64 MiB) -> 48 MiB.
    """
    cap = 64 * 1024 * 1024
    try:
        cap = int(pltpu.get_tpu_info().vmem_capacity_bytes)
    except Exception:
        pass
    return max(32 * 1024 * 1024, min(cap * 3 // 4, 100 * 1024 * 1024))


# ---------------------------------------------------------------------------
# Shared input preparation for the fused k>1 conv kernels.
#
# Pads NHWC activations once (fused transpose/cast/pad), decomposes strides
# into phases so every in-kernel access is a contiguous slice, and splits
# output rows into VMEM-sized blocks.  Row blocks are NON-overlapping; the
# small (QH-row) halo each block needs is passed as a tiny side array and
# staged into a VMEM scratch inside the kernel, so the full activation is
# never duplicated / re-materialized in HBM.
# ---------------------------------------------------------------------------
def _prep_conv_input(x_nhwc, KH, KW, sh, sw, ph, pw, OH, OW, compute_dtype,
                     per_orow_extra_bytes=0, fixed_extra_bytes=0):
    N, H, W, C = x_nhwc.shape
    isz = jnp.dtype(compute_dtype).itemsize
    P = sh * sw
    QH = (KH - 1) // sh                       # row halo (in phase rows)

    total_w = _round_up(max(W + pw, (OW - 1) * sw + KW), sw)
    Wq = total_w // sw

    # --- choose output rows per block: VMEM budget + minimum grid steps ---
    budget = _vmem_limit_bytes() - _VMEM_HEADROOM
    in_row = P * Wq * C * isz                 # one phase-row across phases
    per_row = 3 * in_row + per_orow_extra_bytes   # 2x dbuf input + staging
    fixed = fixed_extra_bytes + 3 * (QH + 1) * in_row
    toh_budget = max(1, (budget - fixed) // max(1, per_row))
    nblk_min = _cdiv(_MIN_GRID_STEPS, N)
    toh = int(max(1, min(OH, toh_budget, _cdiv(OH, nblk_min))))
    nblk = _cdiv(OH, toh)
    OHp = nblk * toh

    # --- single fused transpose/cast/pad/(phase-stack) materialization ----
    total_h = _round_up(max(H + ph, (OHp + QH) * sh), sh)
    x_pad = jnp.pad(x_nhwc.astype(compute_dtype),
                    ((0, 0), (ph, total_h - H - ph),
                     (pw, total_w - W - pw), (0, 0)))
    if sh == 1 and sw == 1:
        xph = x_pad[None]                     # free reshape, no copy
    else:
        # stride-phase decomposition: tap (kh, kw) reads phase (kh%sh, kw%sw)
        # at contiguous offset (kh//sh, kw//sw).
        # TODO(synk): benchmark strided in-kernel reads vs. this extra HBM
        # pass for stride>1 layers.
        xph = jnp.stack([x_pad[:, r::sh, q::sw, :]
                         for r in range(sh) for q in range(sw)], axis=0)

    # --- halo: only QH rows per block (tiny), never whole-block copies ----
    has_halo = (nblk > 1) and (QH > 0)
    main_rows = toh + QH if nblk == 1 else toh
    halo = None
    if has_halo:
        halo = jnp.stack(
            [lax.slice_in_dim(xph, (j + 1) * toh, (j + 1) * toh + QH, axis=2)
             for j in range(nblk)], axis=2)   # (P, N, nblk, QH, Wq, C)

    meta = dict(P=P, Wq=Wq, QH=QH, toh=toh, nblk=nblk,
                main_rows=main_rows, has_halo=has_halo)
    return xph, halo, meta


# ---------------------------------------------------------------------------
# Pallas kernel 1: pointwise (1x1) conv, computed directly in NCHW.
# out[n] = W @ x[n] + b, with H*W tiled onto the lane axis.
# ---------------------------------------------------------------------------
def _pw_conv_kernel(x_ref, w_ref, b_ref, o_ref, *, cdt):
    # x_ref: (Cin, THW)   w_ref: (Cout, Cin)   b_ref: (Cout, 1)
    acc = jnp.dot(w_ref[...], x_ref[...].astype(cdt),
                  preferred_element_type=jnp.float32)
    o_ref[...] = (acc + b_ref[...].astype(jnp.float32)).astype(o_ref.dtype)


def _conv2d_pointwise(x, w, b, stride, padding, OH, OW):
    N, Cin, _, _ = x.shape
    Cout = w.shape[0]
    sh, sw = stride
    ph, pw = padding
    if ph or pw:
        x = jnp.pad(x, ((0, 0), (0, 0), (ph, ph), (pw, pw)))
    if sh > 1 or sw > 1:
        x = x[:, :, ::sh, ::sw]
    x = x[:, :, :OH, :OW]
    HW = OH * OW
    xf = x.reshape(N, Cin, HW)                      # free reshape in NCHW

    cdt = jnp.bfloat16 if x.dtype == jnp.float32 else x.dtype
    HWp = _round_up(HW, 128)
    t_hw = min(512, HWp)
    n_min = _cdiv(_MIN_GRID_STEPS, N)
    while t_hw > 128 and _cdiv(HWp, t_hw) < n_min:  # ensure enough grid steps
        t_hw -= 128
    HWp = _round_up(HWp, t_hw)
    if HWp != HW:
        xf = jnp.pad(xf, ((0, 0), (0, 0), (0, HWp - HW)))
    n_hw = HWp // t_hw

    w2 = w.reshape(Cout, Cin).astype(cdt)
    bias = b.reshape(Cout, 1).astype(jnp.float32)

    flops = 2 * N * HW * Cin * Cout
    bytes_accessed = int(xf.size * xf.dtype.itemsize
                         + w2.size * w2.dtype.itemsize
                         + N * Cout * HWp * x.dtype.itemsize)
    out = pl.pallas_call(
        functools.partial(_pw_conv_kernel, cdt=cdt),
        out_shape=jax.ShapeDtypeStruct((N, Cout, HWp), x.dtype),
        grid_spec=pltpu.PrefetchScalarGridSpec(
            num_scalar_prefetch=0,
            grid=(N, n_hw),
            in_specs=[
                pl.BlockSpec((None, Cin, t_hw), lambda n, h: (n, 0, h)),
                pl.BlockSpec((Cout, Cin), lambda n, h: (0, 0)),
                pl.BlockSpec((Cout, 1), lambda n, h: (0, 0)),
            ],
            out_specs=pl.BlockSpec((None, Cout, t_hw), lambda n, h: (n, 0, h)),
        ),
        compiler_params=pltpu.CompilerParams(
            dimension_semantics=("parallel", "parallel"),
            vmem_limit_bytes=_vmem_limit_bytes()),
        cost_estimate=pl.CostEstimate(flops=flops, transcendentals=0,
                                      bytes_accessed=bytes_accessed),
    )(xf, w2, bias)
    if HWp != HW:
        out = out[:, :, :HW]
    return out.reshape(N, Cout, OH, OW)


# ---------------------------------------------------------------------------
# Pallas kernel 2: fused dense conv (groups == 1, k > 1).
# One grid step = (batch, output-row-block).  Small-Cin layers build the
# im2col contraction in VMEM (single dot with K = KH*KW*Cin); large-Cin
# layers do per-tap dots into a VMEM f32 scratch accumulator.
# ---------------------------------------------------------------------------
def _dense_conv_kernel(*refs, KH, KW, sh, sw, toh, OW, QH, has_halo, pack):
    i = 0
    x_ref = refs[i]; i += 1
    h_ref = None
    if has_halo:
        h_ref = refs[i]; i += 1
    w_ref, b_ref, o_ref = refs[i], refs[i + 1], refs[i + 2]; i += 3
    if has_halo:
        xs_ref = refs[i]; i += 1
        # stage the contiguous (toh+QH)-row window once per grid step
        xs_ref[:, pl.ds(0, toh), :, :] = x_ref[...]
        xs_ref[:, pl.ds(toh, QH), :, :] = h_ref[...]
        src = xs_ref
    else:
        src = x_ref
    acc_ref = refs[i] if not pack else None

    Cin = src.shape[-1]
    Cout = o_ref.shape[-1]

    def tap(kh, kw):
        qh, rh = kh // sh, kh % sh
        qw, rw = kw // sw, kw % sw
        p = rh * sw + rw
        return src[p, pl.ds(qh, toh), pl.ds(qw, OW), :]       # (toh, OW, Cin)

    bias = b_ref[...].astype(jnp.float32)                     # (1, Cout)
    if pack:
        # im2col in VMEM: one MXU dot with K = KH*KW*Cin keeps the 256-wide
        # K passes busy even for narrow early layers.
        col = jnp.concatenate(
            [tap(kh, kw).reshape(toh * OW, Cin)
             for kh in range(KH) for kw in range(KW)], axis=-1)
        acc = jnp.dot(col, w_ref[...], preferred_element_type=jnp.float32)
        o_ref[...] = (acc + bias).reshape(toh, OW, Cout).astype(o_ref.dtype)
    else:
        # per-tap dots accumulated in VMEM f32 scratch (MRB-friendly).
        first = True
        for kh in range(KH):
            for kw in range(KW):
                d = jnp.dot(tap(kh, kw).reshape(toh * OW, Cin),
                            w_ref[kh * KW + kw],
                            preferred_element_type=jnp.float32)
                if first:
                    acc_ref[...] = d
                    first = False
                else:
                    acc_ref[...] += d
        o_ref[...] = (acc_ref[...] + bias
                      ).reshape(toh, OW, Cout).astype(o_ref.dtype)


def _conv2d_dense(x, w, b, stride, padding):
    """groups == 1 convolution.  x: (N,C,H,W), w: (O,C,KH,KW), b: (O,)."""
    N, Cin, H, W_ = x.shape
    Cout, _, KH, KW = w.shape
    sh, sw = stride
    ph, pw = padding
    OH = (H + 2 * ph - KH) // sh + 1
    OW = (W_ + 2 * pw - KW) // sw + 1

    if KH == 1 and KW == 1:
        return _conv2d_pointwise(x, w, b, stride, padding, OH, OW)

    cdt = jnp.bfloat16 if x.dtype == jnp.float32 else x.dtype     # MXU inputs
    in_isz = jnp.dtype(cdt).itemsize
    out_isz = jnp.dtype(x.dtype).itemsize
    Ktot = KH * KW * Cin
    pack = Cin < _PACK_CIN_MAX

    # VMEM accounting beyond the raw input block (acc + 2x output [+ col]).
    per_row_extra = OW * Cout * (4 + 2 * out_isz)
    if pack:
        per_row_extra += 2 * OW * Ktot * in_isz
    fixed_extra = 2 * Ktot * Cout * in_isz + (1 << 20)

    x_nhwc = jnp.transpose(x, (0, 2, 3, 1))
    xph, halo, m = _prep_conv_input(x_nhwc, KH, KW, sh, sw, ph, pw, OH, OW,
                                    cdt, per_row_extra, fixed_extra)
    P, Wq, QH = m["P"], m["Wq"], m["QH"]
    toh, nblk = m["toh"], m["nblk"]
    main_rows, has_halo = m["main_rows"], m["has_halo"]
    OHp = nblk * toh

    if pack:
        w_k = jnp.transpose(w, (2, 3, 1, 0)).reshape(Ktot, Cout).astype(cdt)
        w_spec = pl.BlockSpec((Ktot, Cout), lambda n, j: (0, 0))
    else:
        w_k = jnp.transpose(w, (2, 3, 1, 0)).reshape(KH * KW, Cin, Cout
                                                     ).astype(cdt)
        w_spec = pl.BlockSpec((KH * KW, Cin, Cout), lambda n, j: (0, 0, 0))
    bias = b.reshape(1, Cout).astype(jnp.float32)

    in_specs = [pl.BlockSpec((P, None, main_rows, Wq, Cin),
                             lambda n, j: (0, n, j, 0, 0))]
    args = [xph]
    if has_halo:
        in_specs.append(pl.BlockSpec((P, None, None, QH, Wq, Cin),
                                     lambda n, j: (0, n, j, 0, 0, 0)))
        args.append(halo)
    in_specs += [w_spec, pl.BlockSpec((1, Cout), lambda n, j: (0, 0))]
    args += [w_k, bias]

    scratch = []
    if has_halo:
        scratch.append(pltpu.VMEM((P, toh + QH, Wq, Cin), cdt))
    if not pack:
        scratch.append(pltpu.VMEM((toh * OW, Cout), jnp.float32))

    kernel = functools.partial(_dense_conv_kernel, KH=KH, KW=KW, sh=sh, sw=sw,
                               toh=toh, OW=OW, QH=QH, has_halo=has_halo,
                               pack=pack)
    flops = 2 * N * OHp * OW * Ktot * Cout
    bytes_accessed = int(xph.size * xph.dtype.itemsize
                         + (halo.size * halo.dtype.itemsize if has_halo else 0)
                         + w_k.size * w_k.dtype.itemsize
                         + N * OHp * OW * Cout * out_isz)

    out = pl.pallas_call(
        kernel,
        out_shape=jax.ShapeDtypeStruct((N, OHp, OW, Cout), x.dtype),
        grid_spec=pltpu.PrefetchScalarGridSpec(
            num_scalar_prefetch=0,
            grid=(N, nblk),
            in_specs=in_specs,
            out_specs=pl.BlockSpec((None, toh, OW, Cout),
                                   lambda n, j: (n, j, 0, 0)),
            scratch_shapes=scratch,
        ),
        compiler_params=pltpu.CompilerParams(
            dimension_semantics=("parallel", "parallel"),
            vmem_limit_bytes=_vmem_limit_bytes()),
        cost_estimate=pl.CostEstimate(flops=flops, transcendentals=0,
                                      bytes_accessed=bytes_accessed),
    )(*args)
    # TODO(synk): add a Cout grid axis (parallel) for very wide layers and
    # pad sub-128 Cout so output stores stay lane-dense.
    if OHp != OH:
        out = out[:, :OH]
    return jnp.transpose(out, (0, 3, 1, 2))


# ---------------------------------------------------------------------------
# Pallas kernel 3: depthwise conv (groups == in_channels).
# Channels live on the lane axis; per-tap weights are vector rows in VMEM;
# activations are DMA'd as bf16 (f32 accumulate); same halo-free row blocks.
# ---------------------------------------------------------------------------
def _dw_conv_kernel(*refs, KH, KW, sh, sw, toh, OW, QH, has_halo):
    i = 0
    x_ref = refs[i]; i += 1
    h_ref = None
    if has_halo:
        h_ref = refs[i]; i += 1
    w_ref, b_ref, o_ref = refs[i], refs[i + 1], refs[i + 2]; i += 3
    if has_halo:
        xs_ref = refs[i]
        xs_ref[:, pl.ds(0, toh), :, :] = x_ref[...]
        xs_ref[:, pl.ds(toh, QH), :, :] = h_ref[...]
        src = xs_ref
    else:
        src = x_ref

    C = o_ref.shape[-1]
    acc = jnp.zeros((toh, OW, C), jnp.float32)
    for kh in range(KH):
        qh, rh = kh // sh, kh % sh
        for kw in range(KW):
            qw, rw = kw // sw, kw % sw
            p = rh * sw + rw
            patch = src[p, pl.ds(qh, toh), pl.ds(qw, OW), :
                        ].astype(jnp.float32)
            wk = w_ref[pl.ds(kh * KW + kw, 1), :].astype(jnp.float32)  # (1,C)
            acc = acc + patch * wk
    o_ref[...] = (acc + b_ref[...].astype(jnp.float32)).astype(o_ref.dtype)


def _conv2d_depthwise(x, w, b, stride, padding):
    """groups == in_channels.  x: (N,C,H,W), w: (O,1,KH,KW), O = m*C."""
    N, Cin, H, W_ = x.shape
    Cout, _, KH, KW = w.shape
    assert Cout % Cin == 0, \
        "depthwise path requires out_channels % in_channels == 0"
    mult = Cout // Cin
    sh, sw = stride
    ph, pw = padding
    OH = (H + 2 * ph - KH) // sh + 1
    OW = (W_ + 2 * pw - KW) // sw + 1

    x_nhwc = jnp.transpose(x, (0, 2, 3, 1))
    if mult > 1:
        # channel-multiplier > 1: output channel o reads expanded channel o
        # (== original channel o // mult), matching PyTorch group ordering.
        x_nhwc = jnp.repeat(x_nhwc, mult, axis=-1)

    # Depthwise is memory-bound: DMA activations as bf16, accumulate in f32.
    cdt = jnp.bfloat16 if x.dtype == jnp.float32 else x.dtype
    out_isz = jnp.dtype(x.dtype).itemsize
    per_row_extra = OW * Cout * (4 + 2 * out_isz)
    fixed_extra = 2 * KH * KW * Cout * jnp.dtype(cdt).itemsize + (1 << 20)

    xph, halo, m = _prep_conv_input(x_nhwc, KH, KW, sh, sw, ph, pw, OH, OW,
                                    cdt, per_row_extra, fixed_extra)
    P, Wq, QH = m["P"], m["Wq"], m["QH"]
    toh, nblk = m["toh"], m["nblk"]
    main_rows, has_halo = m["main_rows"], m["has_halo"]
    OHp = nblk * toh

    w_dw = w.reshape(Cout, KH * KW).T.astype(cdt)       # (KH*KW, C) rows
    bias = b.reshape(1, Cout).astype(jnp.float32)

    in_specs = [pl.BlockSpec((P, None, main_rows, Wq, Cout),
                             lambda n, j: (0, n, j, 0, 0))]
    args = [xph]
    if has_halo:
        in_specs.append(pl.BlockSpec((P, None, None, QH, Wq, Cout),
                                     lambda n, j: (0, n, j, 0, 0, 0)))
        args.append(halo)
    in_specs += [pl.BlockSpec((KH * KW, Cout), lambda n, j: (0, 0)),
                 pl.BlockSpec((1, Cout), lambda n, j: (0, 0))]
    args += [w_dw, bias]

    scratch = []
    if has_halo:
        scratch.append(pltpu.VMEM((P, toh + QH, Wq, Cout), cdt))

    kernel = functools.partial(_dw_conv_kernel, KH=KH, KW=KW, sh=sh, sw=sw,
                               toh=toh, OW=OW, QH=QH, has_halo=has_halo)
    flops = 2 * N * OHp * OW * KH * KW * Cout
    bytes_accessed = int(xph.size * xph.dtype.itemsize
                         + (halo.size * halo.dtype.itemsize if has_halo else 0)
                         + w_dw.size * w_dw.dtype.itemsize
                         + N * OHp * OW * Cout * out_isz)

    out = pl.pallas_call(
        kernel,
        out_shape=jax.ShapeDtypeStruct((N, OHp, OW, Cout), x.dtype),
        grid_spec=pltpu.PrefetchScalarGridSpec(
            num_scalar_prefetch=0,
            grid=(N, nblk),
            in_specs=in_specs,
            out_specs=pl.BlockSpec((None, toh, OW, Cout),
                                   lambda n, j: (n, j, 0, 0)),
            scratch_shapes=scratch,
        ),
        compiler_params=pltpu.CompilerParams(
            dimension_semantics=("parallel", "parallel"),
            vmem_limit_bytes=_vmem_limit_bytes()),
        cost_estimate=pl.CostEstimate(flops=flops, transcendentals=0,
                                      bytes_accessed=bytes_accessed),
    )(*args)
    if OHp != OH:
        out = out[:, :OH]
    return jnp.transpose(out, (0, 3, 1, 2))


# ---------------------------------------------------------------------------
# Module equivalent
# ---------------------------------------------------------------------------
class Conv2dPallas:
    def __init__(self, in_channels, out_channels, kernel_size, stride,
                 padding, bias, groups, *, key):
        assert groups in [-1, 1, None]
        if groups in [-1, None] and kernel_size != 1 and kernel_size != (1, 1):
            self.groups = in_channels                      # depthwise branch
        else:
            self.groups = 1 if groups is None else groups  # regular branch
        self.kernel_size = _pair(kernel_size)
        self.stride = _pair(stride)
        self.padding = _pair(padding)
        self.in_channels = in_channels
        self.out_channels = out_channels
        assert in_channels % self.groups == 0
        assert out_channels % self.groups == 0

        kh, kw = self.kernel_size
        fan_in = (in_channels // self.groups) * kh * kw
        bound = 1.0 / float(np.sqrt(fan_in))
        wkey, bkey = jax.random.split(key)
        self.weight = jax.random.uniform(
            wkey, (out_channels, in_channels // self.groups, kh, kw),
            jnp.float32, -bound, bound)
        if bias:
            self.bias = jax.random.uniform(bkey, (out_channels,), jnp.float32,
                                           -bound, bound)
        else:
            self.bias = jnp.zeros((out_channels,), jnp.float32)

        fn = _conv2d_dense if self.groups == 1 else _conv2d_depthwise
        # jit so the wrapper-side layout ops fuse into a single HBM pass.
        self._fn = jax.jit(functools.partial(fn, stride=self.stride,
                                             padding=self.padding))

    def __call__(self, x):
        return self._fn(x, self.weight, self.bias)

    def reference(self, x):
        """Plain-JAX reference (lax conv) for correctness checking."""
        ph, pw = self.padding
        out = lax.conv_general_dilated(
            x, self.weight, window_strides=self.stride,
            padding=[(ph, ph), (pw, pw)],
            dimension_numbers=("NCHW", "OIHW", "NCHW"),
            feature_group_count=self.groups)
        return out + self.bias.reshape(1, -1, 1, 1)


if __name__ == "__main__":
    key = jax.random.PRNGKey(0)
    kx, kx2, k1, k2, k3, k4, k5 = jax.random.split(key, 7)
    x = jax.random.normal(kx, (2, 4, 16, 16), jnp.float32)       # NCHW
    x_wide = jax.random.normal(kx2, (1, 256, 8, 8), jnp.float32)

    cases = [
        # groups=-1, k=3  -> depthwise (groups = in_channels)
        ("depthwise_s2", Conv2dPallas(4, 4, 3, 2, 1, True, -1, key=k1), x),
        # groups=None, k=1 -> pointwise (groups = 1)
        ("pointwise",    Conv2dPallas(4, 8, 1, 1, 0, True, None, key=k2), x),
        # groups=1, k=3, no bias -> regular 3x3 conv (tap-packed im2col path)
        ("standard_3x3", Conv2dPallas(4, 8, 3, 1, 1, False, 1, key=k3), x),
        # stride-1 depthwise (exercises halo + staging in the dw kernel)
        ("depthwise_s1", Conv2dPallas(4, 4, 3, 1, 1, True, -1, key=k4), x),
        # Cin >= 256 -> per-tap dots with VMEM scratch accumulator
        ("wide_cin_3x3", Conv2dPallas(256, 64, 3, 1, 1, True, 1, key=k5),
         x_wide),
    ]

    ok = True
    for name, conv, xin in cases:
        out = jax.block_until_ready(conv(xin))
        ref = jax.block_until_ready(conv.reference(xin))
        # Tolerance loosened because the kernels use bf16 MXU/VPU operands
        # (f32 accumulation); the f32 lax reference differs at ~1e-3 level.
        if out.shape != ref.shape or not np.allclose(np.asarray(out),
                                                     np.asarray(ref),
                                                     rtol=2e-2, atol=5e-2):
            ok = False
            err = np.max(np.abs(np.asarray(out) - np.asarray(ref)))
            print(f"MISMATCH in {name}: shape {out.shape} vs {ref.shape}, "
                  f"max err {err}")

    if ok:
        print("KERNEL_OK")
</pallas_src>

<mosaic_0001>
module attributes {stable_mosaic.version = 11 : i64} {
  func.func @_dw_conv_kernel(%arg0: i32, %arg1: i32, %arg2: memref<4x1x4x9x4xbf16, #tpu.memory_space<vmem>>, %arg3: memref<4x1x1x1x9x4xbf16, #tpu.memory_space<vmem>>, %arg4: memref<9x4xbf16, #tpu.memory_space<vmem>>, %arg5: memref<1x4xf32, #tpu.memory_space<vmem>>, %arg6: memref<1x4x8x4xf32, #tpu.memory_space<vmem>>, %arg7: memref<4x5x9x4xbf16, #tpu.memory_space<vmem>>) attributes {dimension_semantics = [#tpu.dimension_semantics<parallel>, #tpu.dimension_semantics<parallel>], iteration_bounds = array<i64: 2, 2>, scalar_prefetch = 0 : i64, scratch_operands = 1 : i64, tpu.core_type = #tpu.core_type<tc>, window_params = [{transform_indices = @transform_0, window_bounds = array<i64: 4, 1, 4, 9, 4>}, {transform_indices = @transform_1, window_bounds = array<i64: 4, 1, 1, 1, 9, 4>}, {pipeline_mode = #tpu.pipeline_mode<synchronous>, transform_indices = @transform_2, window_bounds = array<i64: 9, 4>}, {pipeline_mode = #tpu.pipeline_mode<synchronous>, transform_indices = @transform_3, window_bounds = array<i64: 1, 4>}, {transform_indices = @transform_4, window_bounds = array<i64: 1, 4, 8, 4>}]} {
    %c0 = arith.constant 0 : index
    %c0_0 = arith.constant 0 : index
    %c0_1 = arith.constant 0 : index
    %c0_2 = arith.constant 0 : index
    %c0_3 = arith.constant 0 : index
    %0 = vector.load %arg2[%c0, %c0_0, %c0_1, %c0_2, %c0_3] : memref<4x1x4x9x4xbf16, #tpu.memory_space<vmem>>, vector<4x1x4x9x4xbf16>
    %1 = vector.shape_cast %0 : vector<4x1x4x9x4xbf16> to vector<4x4x9x4xbf16>
    %c0_4 = arith.constant 0 : index
    %c0_5 = arith.constant 0 : index
    %c0_6 = arith.constant 0 : index
    %c0_7 = arith.constant 0 : index
    %2 = vector.load %arg7[%c0_4, %c0_5, %c0_6, %c0_7] : memref<4x5x9x4xbf16, #tpu.memory_space<vmem>>, vector<4x4x9x4xbf16>
    tpu.vector_store %arg7[%c0_4, %c0_5, %c0_6, %c0_7], %1 {strides = array<i32>} : memref<4x5x9x4xbf16, #tpu.memory_space<vmem>>, vector<4x4x9x4xbf16>,
    %c0_8 = arith.constant 0 : index
    %c0_9 = arith.constant 0 : index
    %c0_10 = arith.constant 0 : index
    %c0_11 = arith.constant 0 : index
    %c0_12 = arith.constant 0 : index
    %c0_13 = arith.constant 0 : index
    %3 = vector.load %arg3[%c0_8, %c0_9, %c0_10, %c0_11, %c0_12, %c0_13] : memref<4x1x1x1x9x4xbf16, #tpu.memory_space<vmem>>, vector<4x1x1x1x9x4xbf16>
    %4 = vector.shape_cast %3 : vector<4x1x1x1x9x4xbf16> to vector<4x1x9x4xbf16>
    %c0_14 = arith.constant 0 : index
    %c4 = arith.constant 4 : index
    %c0_15 = arith.constant 0 : index
    %c0_16 = arith.constant 0 : index
    %5 = vector.load %arg7[%c0_14, %c4, %c0_15, %c0_16] : memref<4x5x9x4xbf16, #tpu.memory_space<vmem>>, vector<4x1x9x4xbf16>
    tpu.vector_store %arg7[%c0_14, %c4, %c0_15, %c0_16], %4 {strides = array<i32>} : memref<4x5x9x4xbf16, #tpu.memory_space<vmem>>, vector<4x1x9x4xbf16>,
    %cst = arith.constant 0.000000e+00 : f32
    %6 = vector.broadcast %cst : f32 to vector<4x8x4xf32>
    %c0_17 = arith.constant 0 : index
    %c0_18 = arith.constant 0 : index
    %c0_19 = arith.constant 0 : index
    %c0_20 = arith.constant 0 : index
    %7 = vector.load %arg7[%c0_17, %c0_18, %c0_19, %c0_20] : memref<4x5x9x4xbf16, #tpu.memory_space<vmem>>, vector<1x4x8x4xbf16>
    %8 = vector.shape_cast %7 : vector<1x4x8x4xbf16> to vector<4x8x4xbf16>
    %9 = arith.extf %8 : vector<4x8x4xbf16> to vector<4x8x4xf32>
    %c0_21 = arith.constant 0 : index
    %c0_22 = arith.constant 0 : index
    %10 = vector.load %arg4[%c0_21, %c0_22] : memref<9x4xbf16, #tpu.memory_space<vmem>>, vector<1x4xbf16>
    %11 = arith.extf %10 : vector<1x4xbf16> to vector<1x4xf32>
    %12 = vector.shape_cast %11 : vector<1x4xf32> to vector<1x1x4xf32>
    %13 = vector.broadcast %12 : vector<1x1x4xf32> to vector<4x8x4xf32>
    %14 = arith.mulf %9, %13 : vector<4x8x4xf32>
    %15 = arith.addf %6, %14 : vector<4x8x4xf32>
    %c1 = arith.constant 1 : index
    %c0_23 = arith.constant 0 : index
    %c0_24 = arith.constant 0 : index
    %c0_25 = arith.constant 0 : index
    %16 = vector.load %arg7[%c1, %c0_23, %c0_24, %c0_25] : memref<4x5x9x4xbf16, #tpu.memory_space<vmem>>, vector<1x4x8x4xbf16>
    %17 = vector.shape_cast %16 : vector<1x4x8x4xbf16> to vector<4x8x4xbf16>
    %18 = arith.extf %17 : vector<4x8x4xbf16> to vector<4x8x4xf32>
    %c1_26 = arith.constant 1 : index
    %c0_27 = arith.constant 0 : index
    %19 = vector.load %arg4[%c1_26, %c0_27] : memref<9x4xbf16, #tpu.memory_space<vmem>>, vector<1x4xbf16>
    %20 = arith.extf %19 : vector<1x4xbf16> to vector<1x4xf32>
    %21 = vector.shape_cast %20 : vector<1x4xf32> to vector<1x1x4xf32>
    %22 = vector.broadcast %21 : vector<1x1x4xf32> to vector<4x8x4xf32>
    %23 = arith.mulf %18, %22 : vector<4x8x4xf32>
    %24 = arith.addf %15, %23 : vector<4x8x4xf32>
    %c0_28 = arith.constant 0 : index
    %c0_29 = arith.constant 0 : index
    %c1_30 = arith.constant 1 : index
    %c0_31 = arith.constant 0 : index
    %25 = vector.load %arg7[%c0_28, %c0_29, %c1_30, %c0_31] : memref<4x5x9x4xbf16, #tpu.memory_space<vmem>>, vector<1x4x8x4xbf16>
    %26 = vector.shape_cast %25 : vector<1x4x8x4xbf16> to vector<4x8x4xbf16>
    %27 = arith.extf %26 : vector<4x8x4xbf16> to vector<4x8x4xf32>
    %c2 = arith.constant 2 : index
    %c0_32 = arith.constant 0 : index
    %28 = vector.load %arg4[%c2, %c0_32] : memref<9x4xbf16, #tpu.memory_space<vmem>>, vector<1x4xbf16>
    %29 = arith.extf %28 : vector<1x4xbf16> to vector<1x4xf32>
    %30 = vector.shape_cast %29 : vector<1x4xf32> to vector<1x1x4xf32>
    %31 = vector.broadcast %30 : vector<1x1x4xf32> to vector<4x8x4xf32>
    %32 = arith.mulf %27, %31 : vector<4x8x4xf32>
    %33 = arith.addf %24, %32 : vector<4x8x4xf32>
    %c2_33 = arith.constant 2 : index
    %c0_34 = arith.constant 0 : index
    %c0_35 = arith.constant 0 : index
    %c0_36 = arith.constant 0 : index
    %34 = vector.load %arg7[%c2_33, %c0_34, %c0_35, %c0_36] : memref<4x5x9x4xbf16, #tpu.memory_space<vmem>>, vector<1x4x8x4xbf16>
    %35 = vector.shape_cast %34 : vector<1x4x8x4xbf16> to vector<4x8x4xbf16>
    %36 = arith.extf %35 : vector<4x8x4xbf16> to vector<4x8x4xf32>
    %c3 = arith.constant 3 : index
    %c0_37 = arith.constant 0 : index
    %37 = vector.load %arg4[%c3, %c0_37] : memref<9x4xbf16, #tpu.memory_space<vmem>>, vector<1x4xbf16>
    %38 = arith.extf %37 : vector<1x4xbf16> to vector<1x4xf32>
    %39 = vector.shape_cast %38 : vector<1x4xf32> to vector<1x1x4xf32>
    %40 = vector.broadcast %39 : vector<1x1x4xf32> to vector<4x8x4xf32>
    %41 = arith.mulf %36, %40 : vector<4x8x4xf32>
    %42 = arith.addf %33, %41 : vector<4x8x4xf32>
    %c3_38 = arith.constant 3 : index
    %c0_39 = arith.constant 0 : index
    %c0_40 = arith.constant 0 : index
    %c0_41 = arith.constant 0 : index
    %43 = vector.load %arg7[%c3_38, %c0_39, %c0_40, %c0_41] : memref<4x5x9x4xbf16, #tpu.memory_space<vmem>>, vector<1x4x8x4xbf16>
    %44 = vector.shape_cast %43 : vector<1x4x8x4xbf16> to vector<4x8x4xbf16>
    %45 = arith.extf %44 : vector<4x8x4xbf16> to vector<4x8x4xf32>
    %c4_42 = arith.constant 4 : index
    %c0_43 = arith.constant 0 : index
    %46 = vector.load %arg4[%c4_42, %c0_43] : memref<9x4xbf16, #tpu.memory_space<vmem>>, vector<1x4xbf16>
    %47 = arith.extf %46 : vector<1x4xbf16> to vector<1x4xf32>
    %48 = vector.shape_cast %47 : vector<1x4xf32> to vector<1x1x4xf32>
    %49 = vector.broadcast %48 : vector<1x1x4xf32> to vector<4x8x4xf32>
    %50 = arith.mulf %45, %49 : vector<4x8x4xf32>
    %51 = arith.addf %42, %50 : vector<4x8x4xf32>
    %c2_44 = arith.constant 2 : index
    %c0_45 = arith.constant 0 : index
    %c1_46 = arith.constant 1 : index
    %c0_47 = arith.constant 0 : index
    %52 = vector.load %arg7[%c2_44, %c0_45, %c1_46, %c0_47] : memref<4x5x9x4xbf16, #tpu.memory_space<vmem>>, vector<1x4x8x4xbf16>
    %53 = vector.shape_cast %52 : vector<1x4x8x4xbf16> to vector<4x8x4xbf16>
    %54 = arith.extf %53 : vector<4x8x4xbf16> to vector<4x8x4xf32>
    %c5 = arith.constant 5 : index
    %c0_48 = arith.constant 0 : index
    %55 = vector.load %arg4[%c5, %c0_48] : memref<9x4xbf16, #tpu.memory_space<vmem>>, vector<1x4xbf16>
    %56 = arith.extf %55 : vector<1x4xbf16> to vector<1x4xf32>
    %57 = vector.shape_cast %56 : vector<1x4xf32> to vector<1x1x4xf32>
    %58 = vector.broadcast %57 : vector<1x1x4xf32> to vector<4x8x4xf32>
    %59 = arith.mulf %54, %58 : vector<4x8x4xf32>
    %60 = arith.addf %51, %59 : vector<4x8x4xf32>
    %c0_49 = arith.constant 0 : index
    %c1_50 = arith.constant 1 : index
    %c0_51 = arith.constant 0 : index
    %c0_52 = arith.constant 0 : index
    %61 = vector.load %arg7[%c0_49, %c1_50, %c0_51, %c0_52] : memref<4x5x9x4xbf16, #tpu.memory_space<vmem>>, vector<1x4x8x4xbf16>
    %62 = vector.shape_cast %61 : vector<1x4x8x4xbf16> to vector<4x8x4xbf16>
    %63 = arith.extf %62 : vector<4x8x4xbf16> to vector<4x8x4xf32>
    %c6 = arith.constant 6 : index
    %c0_53 = arith.constant 0 : index
    %64 = vector.load %arg4[%c6, %c0_53] : memref<9x4xbf16, #tpu.memory_space<vmem>>, vector<1x4xbf16>
    %65 = arith.extf %64 : vector<1x4xbf16> to vector<1x4xf32>
    %66 = vector.shape_cast %65 : vector<1x4xf32> to vector<1x1x4xf32>
    %67 = vector.broadcast %66 : vector<1x1x4xf32> to vector<4x8x4xf32>
    %68 = arith.mulf %63, %67 : vector<4x8x4xf32>
    %69 = arith.addf %60, %68 : vector<4x8x4xf32>
    %c1_54 = arith.constant 1 : index
    %c1_55 = arith.constant 1 : index
    %c0_56 = arith.constant 0 : index
    %c0_57 = arith.constant 0 : index
    %70 = vector.load %arg7[%c1_54, %c1_55, %c0_56, %c0_57] : memref<4x5x9x4xbf16, #tpu.memory_space<vmem>>, vector<1x4x8x4xbf16>
    %71 = vector.shape_cast %70 : vector<1x4x8x4xbf16> to vector<4x8x4xbf16>
    %72 = arith.extf %71 : vector<4x8x4xbf16> to vector<4x8x4xf32>
    %c7 = arith.constant 7 : index
    %c0_58 = arith.constant 0 : index
    %73 = vector.load %arg4[%c7, %c0_58] : memref<9x4xbf16, #tpu.memory_space<vmem>>, vector<1x4xbf16>
    %74 = arith.extf %73 : vector<1x4xbf16> to vector<1x4xf32>
    %75 = vector.shape_cast %74 : vector<1x4xf32> to vector<1x1x4xf32>
    %76 = vector.broadcast %75 : vector<1x1x4xf32> to vector<4x8x4xf32>
    %77 = arith.mulf %72, %76 : vector<4x8x4xf32>
    %78 = arith.addf %69, %77 : vector<4x8x4xf32>
    %c0_59 = arith.constant 0 : index
    %c1_60 = arith.constant 1 : index
    %c1_61 = arith.constant 1 : index
    %c0_62 = arith.constant 0 : index
    %79 = vector.load %arg7[%c0_59, %c1_60, %c1_61, %c0_62] : memref<4x5x9x4xbf16, #tpu.memory_space<vmem>>, vector<1x4x8x4xbf16>
    %80 = vector.shape_cast %79 : vector<1x4x8x4xbf16> to vector<4x8x4xbf16>
    %81 = arith.extf %80 : vector<4x8x4xbf16> to vector<4x8x4xf32>
    %c8 = arith.constant 8 : index
    %c0_63 = arith.constant 0 : index
    %82 = vector.load %arg4[%c8, %c0_63] : memref<9x4xbf16, #tpu.memory_space<vmem>>, vector<1x4xbf16>
    %83 = arith.extf %82 : vector<1x4xbf16> to vector<1x4xf32>
    %84 = vector.shape_cast %83 : vector<1x4xf32> to vector<1x1x4xf32>
    %85 = vector.broadcast %84 : vector<1x1x4xf32> to vector<4x8x4xf32>
    %86 = arith.mulf %81, %85 : vector<4x8x4xf32>
    %87 = arith.addf %78, %86 : vector<4x8x4xf32>
    %c0_64 = arith.constant 0 : index
    %c0_65 = arith.constant 0 : index
    %88 = vector.load %arg5[%c0_64, %c0_65] : memref<1x4xf32, #tpu.memory_space<vmem>>, vector<1x4xf32>
    %89 = vector.shape_cast %88 : vector<1x4xf32> to vector<1x1x4xf32>
    %90 = vector.broadcast %89 : vector<1x1x4xf32> to vector<4x8x4xf32>
    %91 = arith.addf %87, %90 : vector<4x8x4xf32>
    %c0_66 = arith.constant 0 : index
    %c0_67 = arith.constant 0 : index
    %c0_68 = arith.constant 0 : index
    %c0_69 = arith.constant 0 : index
    %92 = vector.load %arg6[%c0_66, %c0_67, %c0_68, %c0_69] : memref<1x4x8x4xf32, #tpu.memory_space<vmem>>, vector<1x4x8x4xf32>
    %93 = vector.shape_cast %92 : vector<1x4x8x4xf32> to vector<4x8x4xf32>
    %94 = vector.shape_cast %91 : vector<4x8x4xf32> to vector<1x4x8x4xf32>
    tpu.vector_store %arg6[%c0_66, %c0_67, %c0_68, %c0_69], %94 {strides = array<i32>} : memref<1x4x8x4xf32, #tpu.memory_space<vmem>>, vector<1x4x8x4xf32>,
    return
  }
  func.func @transform_0(%arg0: i32, %arg1: i32) -> (i32, i32, i32, i32, i32) {
    %c0_i32 = arith.constant 0 : i32
    %c0_i32_0 = arith.constant 0 : i32
    %c0_i32_1 = arith.constant 0 : i32
    %c0_i32_2 = arith.constant 0 : i32
    return %c0_i32, %arg0, %arg1, %c0_i32_0, %c0_i32_1 : i32, i32, i32, i32, i32
  }
  func.func @transform_1(%arg0: i32, %arg1: i32) -> (i32, i32, i32, i32, i32, i32) {
    %c0_i32 = arith.constant 0 : i32
    %c0_i32_0 = arith.constant 0 : i32
    %c0_i32_1 = arith.constant 0 : i32
    %c0_i32_2 = arith.constant 0 : i32
    %c0_i32_3 = arith.constant 0 : i32
    return %c0_i32, %arg0, %arg1, %c0_i32_0, %c0_i32_1, %c0_i32_2 : i32, i32, i32, i32, i32, i32
  }
  func.func @transform_2(%arg0: i32, %arg1: i32) -> (i32, i32) {
    %c0_i32 = arith.constant 0 : i32
    %c0_i32_0 = arith.constant 0 : i32
    %c0_i32_1 = arith.constant 0 : i32
    return %c0_i32, %c0_i32_0 : i32, i32
  }
  func.func @transform_3(%arg0: i32, %arg1: i32) -> (i32, i32) {
    %c0_i32 = arith.constant 0 : i32
    %c0_i32_0 = arith.constant 0 : i32
    %c0_i32_1 = arith.constant 0 : i32
    return %c0_i32, %c0_i32_0 : i32, i32
  }
  func.func @transform_4(%arg0: i32, %arg1: i32) -> (i32, i32, i32, i32) {
    %c0_i32 = arith.constant 0 : i32
    %c0_i32_0 = arith.constant 0 : i32
    %c0_i32_1 = arith.constant 0 : i32
    return %arg0, %arg1, %c0_i32, %c0_i32_0 : i32, i32, i32, i32
  }
}

</mosaic_0001>

<llo_original>
// kernel: _conv2d_depthwise.1
$region0: #{_conv2d_depthwise.1}
  #allocation0 [shape = 'u32[]', space=smem, size = 0x4, offset = 0x4, fixed_abs, tag = 'smem constant byte address 0x4 - core index']
  #allocation1 [shape = 'u32[144,128]{1,0:T(1,128)}', space=vmem, size = 0x12000, scoped, tag = 'internal scratch']
  #allocation2 [shape = 'bf16[4,5,9,4]{3,2,1,0:T(8,128)(2,1)}', space=vmem, size = 0x14000, scoped, tag = 'scratch operand']
  %s0 = inlined_call_operand.vmem [shape: bf16[4,2,9,9,4], index: 0, kind: input, shape index: {}]
  %s1 = inlined_call_operand.vmem [shape: bf16[4,2,2,1,9,4], index: 1, kind: input, shape index: {}]
  %s2 = inlined_call_operand.vmem [shape: bf16[9,4], index: 2, kind: input, shape index: {}]
  %s3 = inlined_call_operand.vmem [shape: f32[1,4], index: 3, kind: input, shape index: {}]
  %s4 = inlined_call_operand.vmem [shape: f32[2,8,8,4], index: 4, kind: output, shape index: {}]
  %s5 = sld [smem:[#allocation0]]
  $region152: #{_conv2d_depthwise.1} parent=0
    _
  %s7 = ssub.s32 1, %s5
  %s8 = scalar_select 0, %s7, %s5
  $region1: #{_conv2d_depthwise.1} parent=0
    #allocation3 [shape = 'u8[131072]{0}', space=vmem, size = 0x20000, scoped, tag = 'input window, operand 0']
    #allocation4 [shape = 'u8[32768]{0}', space=vmem, size = 0x8000, scoped, tag = 'input window, operand 1']
    loop: start=0, step=1, limit=6
    $region2: #{_conv2d_depthwise.1} parent=1 // loop_pre_header
      _
    $region3: #{_conv2d_depthwise.1} parent=1 // loop_header
      %s10 = sphi 0, %s14
      %p11 = scmp.ge.s32.totalorder %s10, 6
      %s17 = sphi 0, %s29
      %s18 = sphi 0, %s25
      %s19 = sphi 0, %s17
      %s20 = sphi 0, %s18
      %s21 = sphi 0, %s19
      %s22 = sphi 0, %s20
      %s34 = sphi 0, %s36
      %s37 = sphi 0, %s34
      %s38 = sphi 0, %s37
      %s54 = sphi 0, %s38
      %s62 = sphi 0, %s64
      %s65 = sphi 0, %s62
      %s66 = sphi 0, %s65
      %s82 = sphi 0, %s66
      %s86 = sphi 0, %s86
      %s88 = sphi 0, %s86
      %s89 = sphi 0, %s88
      %s103 = sphi 0, %s89
      %s107 = sphi 0, %s107
      %s109 = sphi 0, %s107
      %s110 = sphi 0, %s109
      %s124 = sphi 0, %s110
      %s132 = sphi 0, %s134
      %s135 = sphi 0, %s132
      %s136 = sphi 0, %s135
      %s152 = sphi 0, %s136
    $region4: #{_conv2d_depthwise.1} parent=1 // loop_header_branch
      %13 = sbr.rel (%p11) target = $region8
    $region5: #{_conv2d_depthwise.1} parent=1 // loop_body
      %s15 = ssub.s32 %s10, 1
      %s16 = ssub.s32 %s10, 2
      %s23 = sadd.s32 1, %s18
      %p24 = scmp.ge.s32.totalorder %s23, 2
      %s25 = scalar_select %p24, 0, %s23
      %s26 = sadd.s32 1, %s17
      %s27 = scalar_select %p24, %s26, %s17
      %p28 = scmp.ge.s32.totalorder %s27, 2
      %s29 = scalar_select %p28, 0, %s27
      %s30 = ssub.s32 %s17, %s29
      %s31 = ssub.s32 %s18, %s25
      %s32 = sor.u32 %s30, %s31
      %p33 = scmp.eq.s32.totalorder %s32, 0
      %s35 = sadd.s32 %s34, 1
      %s36 = scalar_select %p33, %s34, %s35
      %p39 = pneg %p33
      %p40 = scmp.eq.s32.totalorder %s10, 3
      %p41 = por %p39, %p40
      %p42 = scmp.ne.s32.totalorder %s34, %s37
      %p43 = scmp.eq.s32.totalorder %s10, 0
      %p44 = por %p42, %p43
      %p45 = scmp.ne.s32.totalorder %s34, %s37
      %p46 = scmp.eq.s32.totalorder %s15, 3
      %p47 = por %p45, %p46
      %p48 = scmp.ne.s32.totalorder %s37, %s38
      %p49 = scmp.eq.s32.totalorder %s15, 0
      %p50 = por %p48, %p49
      %p51 = scmp.ne.s32.totalorder %s37, %s38
      %p52 = scmp.eq.s32.totalorder %s16, 3
      %p53 = por %p51, %p52
      %p55 = scmp.ne.s32.totalorder %s38, %s54
      %p56 = scmp.eq.s32.totalorder %s16, 0
      %p57 = por %p55, %p56
      %s58 = ssub.s32 %s17, %s29
      %s59 = ssub.s32 %s18, %s25
      %s60 = sor.u32 %s58, %s59
      %p61 = scmp.eq.s32.totalorder %s60, 0
      %s63 = sadd.s32 %s62, 1
      %s64 = scalar_select %p61, %s62, %s63
      %p67 = pneg %p61
      %p68 = scmp.eq.s32.totalorder %s10, 3
      %p69 = por %p67, %p68
      %p70 = scmp.ne.s32.totalorder %s62, %s65
      %p71 = scmp.eq.s32.totalorder %s10, 0
      %p72 = por %p70, %p71
      %p73 = scmp.ne.s32.totalorder %s62, %s65
      %p74 = scmp.eq.s32.totalorder %s15, 3
      %p75 = por %p73, %p74
      %p76 = scmp.ne.s32.totalorder %s65, %s66
      %p77 = scmp.eq.s32.totalorder %s15, 0
      %p78 = por %p76, %p77
      %p79 = scmp.ne.s32.totalorder %s65, %s66
      %p80 = scmp.eq.s32.totalorder %s16, 3
      %p81 = por %p79, %p80
      %p83 = scmp.ne.s32.totalorder %s66, %s82
      %p84 = scmp.eq.s32.totalorder %s16, 0
      %p85 = por %p83, %p84
      %s87 = sadd.s32 %s86, 1
      %p90 = scmp.eq.s32.totalorder %s10, 3
      %p91 = scmp.ne.s32.totalorder %s86, %s88
      %p92 = scmp.eq.s32.totalorder %s10, 0
      %p93 = por %p91, %p92
      %p94 = scmp.ne.s32.totalorder %s86, %s88
      %p95 = scmp.eq.s32.totalorder %s15, 3
      %p96 = por %p94, %p95
      %p97 = scmp.ne.s32.totalorder %s88, %s89
      %p98 = scmp.eq.s32.totalorder %s15, 0
      %p99 = por %p97, %p98
      %p100 = scmp.ne.s32.totalorder %s88, %s89
      %p101 = scmp.eq.s32.totalorder %s16, 3
      %p102 = por %p100, %p101
      %p104 = scmp.ne.s32.totalorder %s89, %s103
      %p105 = scmp.eq.s32.totalorder %s16, 0
      %p106 = por %p104, %p105
      %s108 = sadd.s32 %s107, 1
      %p111 = scmp.eq.s32.totalorder %s10, 3
      %p112 = scmp.ne.s32.totalorder %s107, %s109
      %p113 = scmp.eq.s32.totalorder %s10, 0
      %p114 = por %p112, %p113
      %p115 = scmp.ne.s32.totalorder %s107, %s109
      %p116 = scmp.eq.s32.totalorder %s15, 3
      %p117 = por %p115, %p116
      %p118 = scmp.ne.s32.totalorder %s109, %s110
      %p119 = scmp.eq.s32.totalorder %s15, 0
      %p120 = por %p118, %p119
      %p121 = scmp.ne.s32.totalorder %s109, %s110
      %p122 = scmp.eq.s32.totalorder %s16, 3
      %p123 = por %p121, %p122
      %p125 = scmp.ne.s32.totalorder %s110, %s124
      %p126 = scmp.eq.s32.totalorder %s16, 0
      %p127 = por %p125, %p126
      %s128 = ssub.s32 %s17, %s29
      %s129 = ssub.s32 %s18, %s25
      %s130 = sor.u32 %s128, %s129
      %p131 = scmp.eq.s32.totalorder %s130, 0
      %s133 = sadd.s32 %s132, 1
      %s134 = scalar_select %p131, %s132, %s133
      %p137 = pneg %p131
      %p138 = scmp.eq.s32.totalorder %s10, 3
      %p139 = por %p137, %p138
      %p140 = scmp.ne.s32.totalorder %s132, %s135
      %p141 = scmp.eq.s32.totalorder %s10, 0
      %p142 = por %p140, %p141
      %p143 = scmp.ne.s32.totalorder %s132, %s135
      %p144 = scmp.eq.s32.totalorder %s15, 3
      %p145 = por %p143, %p144
      %p146 = scmp.ne.s32.totalorder %s135, %s136
      %p147 = scmp.eq.s32.totalorder %s15, 0
      %p148 = por %p146, %p147
      %p149 = scmp.ne.s32.totalorder %s135, %s136
      %p150 = scmp.eq.s32.totalorder %s16, 3
      %p151 = por %p149, %p150
      %p153 = scmp.ne.s32.totalorder %s136, %s152
      %p154 = scmp.eq.s32.totalorder %s16, 0
      %p155 = por %p153, %p154
      %p156 = scmp.le.s32.totalorder 1, %s10
      %p157 = scmp.lt.s32.totalorder %s10, 5
      %p158 = pnand %p156, %p157
      %p159 = pneg %p158
      // Predicated region
      $region9: #{_conv2d_depthwise.1} parent=5 // pred_check
        _
      $region10: #{_conv2d_depthwise.1} parent=5 // pred_check_branch
        %161 = sbr.rel (%p158) target = $region12
      $region11: #{_conv2d_depthwise.1} parent=5 // pred_region
        %s162 = ssub.s32 %s10, 1
        // Predicated region
        $region13: #{_conv2d_depthwise.1} parent=11 // pred_check
          %p163 = pneg %p99
        $region14: #{_conv2d_depthwise.1} parent=11 // pred_check_branch
          %165 = sbr.rel (%p163) target = $region16
        $region15: #{_conv2d_depthwise.1} parent=11 // pred_region
          _
        $region16: #{_conv2d_depthwise.1} parent=11 // pred_fallthru
          _
        // Predicated region
        $region17: #{_conv2d_depthwise.1} parent=11 // pred_check
          %p166 = pneg %p120
        $region18: #{_conv2d_depthwise.1} parent=11 // pred_check_branch
          %168 = sbr.rel (%p166) target = $region20
        $region19: #{_conv2d_depthwise.1} parent=11 // pred_region
          _
        $region20: #{_conv2d_depthwise.1} parent=11 // pred_fallthru
          _
      $region12: #{_conv2d_depthwise.1} parent=5 // pred_fallthru
        _
      %p169 = scmp.lt.s32.totalorder %s10, 4
      // Predicated region
      $region21: #{_conv2d_depthwise.1} parent=5 // pred_check
        %p170 = pneg %p169
      $region22: #{_conv2d_depthwise.1} parent=5 // pred_check_branch
        %172 = sbr.rel (%p170) target = $region24
      $region23: #{_conv2d_depthwise.1} parent=5 // pred_region
        // Predicated region
        $region25: #{_conv2d_depthwise.1} parent=23 // pred_check
          %p173 = pneg %p44
        $region26: #{_conv2d_depthwise.1} parent=23 // pred_check_branch
          %175 = sbr.rel (%p173) target = $region28
        $region27: #{_conv2d_depthwise.1} parent=23 // pred_region
          %s176 = sand.u32 %s34, 1
          %s177 = sand.u32 %s34, 1
          %s178 = smul.addr %s177, 128
          %s179 = scalar_lea.vmem [#allocation3], %s178
          %s180 = smul.u32 4, %s18
          %s181 = ssub.s32 9, %s180
          %p182 = scmp.lt.s32.totalorder %s181, 4
          %s183 = scalar_select %p182, %s181, 4
          %s184 = smul.u32 256, %s183
          %s185 = smul.u32 %s184, 2
          %p186 = scmp.ne.s32.totalorder 0, %s185
          %s187 = smul.addr %s180, 2
          %s188 = smul.addr %s17, 18
          %s189 = sadd.s32 %s187, %s188
          %s190 = smul.addr %s189, 4
          %s191 = scalar_lea.vmem %s0, %s190
          %s192 = smul.u32 %s183, 2
          // Predicated region
          $region29: #{_conv2d_depthwise.1} parent=27 // pred_check
            %p193 = pneg %p186
          $region30: #{_conv2d_depthwise.1} parent=27 // pred_check_branch
            %195 = sbr.rel (%p193) target = $region32
          $region31: #{_conv2d_depthwise.1} parent=27 // pred_region
            // Predicated region
            $region33: #{_conv2d_depthwise.1} parent=31 // pred_check
              _
            $region34: #{_conv2d_depthwise.1} parent=31 // pred_check_branch
              %197 = sbr.rel target = $region36
            $region35: #{_conv2d_depthwise.1} parent=31 // pred_region
              // Predicated region
              $region55: #{_conv2d_depthwise.1} parent=35 // pred_check
                _
              $region56: #{_conv2d_depthwise.1} parent=35 // pred_check_branch
                %314 = sbr.rel (0) target = $region58
              $region57: #{_conv2d_depthwise.1} parent=35 // pred_region
                %s315 = sshrl.u32 %s192, 3
                // While loop
                $region59: #{_conv2d_depthwise.1} parent=57 // loop_pre_header
                  _
                $region60: #{_conv2d_depthwise.1} parent=57 // loop_header
                  %s317 = sphi 0, %s319
                  %p318 = scmp.ge.s32.totalorder %s317, %s315
                  %s322 = sphi 0, %s327
                  %s323 = sphi %s191, %s330
                  %s324 = sphi %s179, %s331
                $region61: #{_conv2d_depthwise.1} parent=57 // loop_header_branch
                  %321 = sbr.rel (%p318) target = $region65
                $region62: #{_conv2d_depthwise.1} parent=57 // loop_body
                  %s325 = sadd.s32 1, %s322
                  %p326 = scmp.ge.s32.totalorder %s325, %s315
                  %s327 = scalar_select %p326, 0, %s325
                  %s328 = smul.u32 %s327, 32
                  %s329 = smul.u32 %s327, 32
                  %s330 = scalar_lea.vmem %s191, %s328
                  %s331 = scalar_lea.vmem %s179, %s329 [#allocation3]
                $region63: #{_conv2d_depthwise.1} parent=57 // loop_footer
                  %s319 = sadd.s32 %s317, 1
                $region64: #{_conv2d_depthwise.1} parent=57 // loop_footer_branch
                  %316 = sbr.rel target = $region60
                $region65: #{_conv2d_depthwise.1} parent=57 // loop_exit
                  _
                %s332 = sshrl.u32 %s192, 3
                %s333 = sand.u32 %s192, 7
                %s334 = smul.u32 %s332, 8
                %s335 = smul.u32 4, %s334
                %s336 = scalar_lea.vmem %s191, %s335
                %s337 = smul.u32 4, %s334
                %s338 = scalar_lea.vmem %s179, %s337 [#allocation3]
                // While loop
                $region66: #{_conv2d_depthwise.1} parent=57 // loop_pre_header
                  _
                $region67: #{_conv2d_depthwise.1} parent=57 // loop_header
                  %s340 = sphi 0, %s342
                  %p341 = scmp.ge.s32.totalorder %s340, %s333
                  %s345 = sphi 0, %s350
                  %s346 = sphi %s336, %s353
                  %s347 = sphi %s338, %s354
                $region68: #{_conv2d_depthwise.1} parent=57 // loop_header_branch
                  %344 = sbr.rel (%p341) target = $region72
                $region69: #{_conv2d_depthwise.1} parent=57 // loop_body
                  %s348 = sadd.s32 1, %s345
                  %p349 = scmp.ge.s32.totalorder %s348, %s333
                  %s350 = scalar_select %p349, 0, %s348
                  %s351 = smul.u32 %s350, 4
                  %s352 = smul.u32 %s350, 4
                  %s353 = scalar_lea.vmem %s336, %s351
                  %s354 = scalar_lea.vmem %s338, %s352 [#allocation3]
                $region70: #{_conv2d_depthwise.1} parent=57 // loop_footer
                  %s342 = sadd.s32 %s340, 1
                $region71: #{_conv2d_depthwise.1} parent=57 // loop_footer_branch
                  %339 = sbr.rel target = $region67
                $region72: #{_conv2d_depthwise.1} parent=57 // loop_exit
                  _
                %s356 = sshrl.u32 %s192, 3
                // While loop
                $region73: #{_conv2d_depthwise.1} parent=57 // loop_pre_header
                  _
                $region74: #{_conv2d_depthwise.1} parent=57 // loop_header
                  %s358 = sphi 0, %s360
                  %p359 = scmp.ge.s32.totalorder %s358, %s356
                  %s363 = sphi 0, %s432
                  %s364 = sphi %s191, %s435
                  %s365 = sphi %s179, %s436
                $region75: #{_conv2d_depthwise.1} parent=57 // loop_header_branch
                  %362 = sbr.rel (%p359) target = $region79
                $region76: #{_conv2d_depthwise.1} parent=57 // loop_body
                  %v366 = vld [vmem:[%s364] sm:$0xf]
                  %367 = vst [vmem:[%s365] sm:$0xf] %v366
                  %v368 = vld [vmem:[%s364 + $0x4] sm:$0xf]
                  %369 = vst [vmem:[%s365 + $0x4] sm:$0xf] %v368
                  %v370 = vld [vmem:[%s364 + $0x8] sm:$0xf]
                  %371 = vst [vmem:[%s365 + $0x8] sm:$0xf] %v370
                  %v372 = vld [vmem:[%s364 + $0xc] sm:$0xf]
                  %373 = vst [vmem:[%s365 + $0xc] sm:$0xf] %v372
                  %v374 = vld [vmem:[%s364 + $0x10] sm:$0xf]
                  %375 = vst [vmem:[%s365 + $0x10] sm:$0xf] %v374
                  %v376 = vld [vmem:[%s364 + $0x14] sm:$0xf]
                  %377 = vst [vmem:[%s365 + $0x14] sm:$0xf] %v376
                  %v378 = vld [vmem:[%s364 + $0x18] sm:$0xf]
                  %379 = vst [vmem:[%s365 + $0x18] sm:$0xf] %v378
                  %v380 = vld [vmem:[%s364 + $0x1c] sm:$0xf]
                  %381 = vst [vmem:[%s365 + $0x1c] sm:$0xf] %v380
                  %v382 = vld [vmem:[%s364 + $0x90] sm:$0xf]
                  %383 = vst [vmem:[%s365 + $0x20] sm:$0xf] %v382
                  %v384 = vld [vmem:[%s364 + $0x94] sm:$0xf]
                  %385 = vst [vmem:[%s365 + $0x24] sm:$0xf] %v384
                  %v386 = vld [vmem:[%s364 + $0x98] sm:$0xf]
                  %387 = vst [vmem:[%s365 + $0x28] sm:$0xf] %v386
                  %v388 = vld [vmem:[%s364 + $0x9c] sm:$0xf]
                  %389 = vst [vmem:[%s365 + $0x2c] sm:$0xf] %v388
                  %v390 = vld [vmem:[%s364 + $0xa0] sm:$0xf]
                  %391 = vst [vmem:[%s365 + $0x30] sm:$0xf] %v390
                  %v392 = vld [vmem:[%s364 + $0xa4] sm:$0xf]
                  %393 = vst [vmem:[%s365 + $0x34] sm:$0xf] %v392
                  %v394 = vld [vmem:[%s364 + $0xa8] sm:$0xf]
                  %395 = vst [vmem:[%s365 + $0x38] sm:$0xf] %v394
                  %v396 = vld [vmem:[%s364 + $0xac] sm:$0xf]
                  %397 = vst [vmem:[%s365 + $0x3c] sm:$0xf] %v396
                  %v398 = vld [vmem:[%s364 + $0x120] sm:$0xf]
                  %399 = vst [vmem:[%s365 + $0x40] sm:$0xf] %v398
                  %v400 = vld [vmem:[%s364 + $0x124] sm:$0xf]
                  %401 = vst [vmem:[%s365 + $0x44] sm:$0xf] %v400
                  %v402 = vld [vmem:[%s364 + $0x128] sm:$0xf]
                  %403 = vst [vmem:[%s365 + $0x48] sm:$0xf] %v402
                  %v404 = vld [vmem:[%s364 + $0x12c] sm:$0xf]
                  %405 = vst [vmem:[%s365 + $0x4c] sm:$0xf] %v404
                  %v406 = vld [vmem:[%s364 + $0x130] sm:$0xf]
                  %407 = vst [vmem:[%s365 + $0x50] sm:$0xf] %v406
                  %v408 = vld [vmem:[%s364 + $0x134] sm:$0xf]
                  %409 = vst [vmem:[%s365 + $0x54] sm:$0xf] %v408
                  %v410 = vld [vmem:[%s364 + $0x138] sm:$0xf]
                  %411 = vst [vmem:[%s365 + $0x58] sm:$0xf] %v410
                  %v412 = vld [vmem:[%s364 + $0x13c] sm:$0xf]
                  %413 = vst [vmem:[%s365 + $0x5c] sm:$0xf] %v412
                  %v414 = vld [vmem:[%s364 + $0x1b0] sm:$0xf]
                  %415 = vst [vmem:[%s365 + $0x60] sm:$0xf] %v414
                  %v416 = vld [vmem:[%s364 + $0x1b4] sm:$0xf]
                  %417 = vst [vmem:[%s365 + $0x64] sm:$0xf] %v416
                  %v418 = vld [vmem:[%s364 + $0x1b8] sm:$0xf]
                  %419 = vst [vmem:[%s365 + $0x68] sm:$0xf] %v418
                  %v420 = vld [vmem:[%s364 + $0x1bc] sm:$0xf]
                  %421 = vst [vmem:[%s365 + $0x6c] sm:$0xf] %v420
                  %v422 = vld [vmem:[%s364 + $0x1c0] sm:$0xf]
                  %423 = vst [vmem:[%s365 + $0x70] sm:$0xf] %v422
                  %v424 = vld [vmem:[%s364 + $0x1c4] sm:$0xf]
                  %425 = vst [vmem:[%s365 + $0x74] sm:$0xf] %v424
                  %v426 = vld [vmem:[%s364 + $0x1c8] sm:$0xf]
                  %427 = vst [vmem:[%s365 + $0x78] sm:$0xf] %v426
                  %v428 = vld [vmem:[%s364 + $0x1cc] sm:$0xf]
                  %429 = vst [vmem:[%s365 + $0x7c] sm:$0xf] %v428
                  %s430 = sadd.s32 1, %s363
                  %p431 = scmp.ge.s32.totalorder %s430, %s356
                  %s432 = scalar_select %p431, 0, %s430
                  %s433 = smul.u32 %s432, 32
                  %s434 = smul.u32 %s432, 32
                  %s435 = scalar_lea.vmem %s191, %s433
                  %s436 = scalar_lea.vmem %s179, %s434 [#allocation3]
                $region77: #{_conv2d_depthwise.1} parent=57 // loop_footer
                  %s360 = sadd.s32 %s358, 1
                $region78: #{_conv2d_depthwise.1} parent=57 // loop_footer_branch
                  %357 = sbr.rel target = $region74
                $region79: #{_conv2d_depthwise.1} parent=57 // loop_exit
                  _
                %s437 = sshrl.u32 %s192, 3
                %s438 = sand.u32 %s192, 7
                %s439 = smul.u32 %s437, 8
                %s440 = smul.u32 4, %s439
                %s441 = scalar_lea.vmem %s191, %s440
                %s442 = smul.u32 4, %s439
                %s443 = scalar_lea.vmem %s179, %s442 [#allocation3]
                // While loop
                $region80: #{_conv2d_depthwise.1} parent=57 // loop_pre_header
                  _
                $region81: #{_conv2d_depthwise.1} parent=57 // loop_header
                  %s445 = sphi 0, %s447
                  %p446 = scmp.ge.s32.totalorder %s445, %s438
                  %s450 = sphi 0, %s463
                  %s451 = sphi %s441, %s466
                  %s452 = sphi %s443, %s467
                $region82: #{_conv2d_depthwise.1} parent=57 // loop_header_branch
                  %449 = sbr.rel (%p446) target = $region86
                $region83: #{_conv2d_depthwise.1} parent=57 // loop_body
                  %v453 = vld [vmem:[%s451] sm:$0xf]
                  %454 = vst [vmem:[%s452] sm:$0xf] %v453
                  %v455 = vld [vmem:[%s451 + $0x90] sm:$0xf]
                  %456 = vst [vmem:[%s452 + $0x20] sm:$0xf] %v455
                  %v457 = vld [vmem:[%s451 + $0x120] sm:$0xf]
                  %458 = vst [vmem:[%s452 + $0x40] sm:$0xf] %v457
                  %v459 = vld [vmem:[%s451 + $0x1b0] sm:$0xf]
                  %460 = vst [vmem:[%s452 + $0x60] sm:$0xf] %v459
                  %s461 = sadd.s32 1, %s450
                  %p462 = scmp.ge.s32.totalorder %s461, %s438
                  %s463 = scalar_select %p462, 0, %s461
                  %s464 = smul.u32 %s463, 4
                  %s465 = smul.u32 %s463, 4
                  %s466 = scalar_lea.vmem %s441, %s464
                  %s467 = scalar_lea.vmem %s443, %s465 [#allocation3]
                $region84: #{_conv2d_depthwise.1} parent=57 // loop_footer
                  %s447 = sadd.s32 %s445, 1
                $region85: #{_conv2d_depthwise.1} parent=57 // loop_footer_branch
                  %444 = sbr.rel target = $region81
                $region86: #{_conv2d_depthwise.1} parent=57 // loop_exit
                  _
              $region58: #{_conv2d_depthwise.1} parent=35 // pred_fallthru
                _
            $region36: #{_conv2d_depthwise.1} parent=31 // pred_fallthru
              _
            // Predicated region
            $region37: #{_conv2d_depthwise.1} parent=31 // pred_check
              _
            $region38: #{_conv2d_depthwise.1} parent=31 // pred_check_branch
              %199 = sbr.rel (0) target = $region40
            $region39: #{_conv2d_depthwise.1} parent=31 // pred_region
              %s201 = sshrl.u32 %s192, 3
              // While loop
              $region41: #{_conv2d_depthwise.1} parent=39 // loop_pre_header
                _
              $region42: #{_conv2d_depthwise.1} parent=39 // loop_header
                %s203 = sphi 0, %s205
                %p204 = scmp.ge.s32.totalorder %s203, %s201
                %s208 = sphi 0, %s277
                %s209 = sphi %s191, %s280
                %s210 = sphi %s179, %s281
              $region43: #{_conv2d_depthwise.1} parent=39 // loop_header_branch
                %207 = sbr.rel (%p204) target = $region47
              $region44: #{_conv2d_depthwise.1} parent=39 // loop_body
                %v211 = vld [vmem:[%s209] sm:$0xf]
                %212 = vst [vmem:[%s210] sm:$0xf] %v211
                %v213 = vld [vmem:[%s209 + $0x4] sm:$0xf]
                %214 = vst [vmem:[%s210 + $0x4] sm:$0xf] %v213
                %v215 = vld [vmem:[%s209 + $0x8] sm:$0xf]
                %216 = vst [vmem:[%s210 + $0x8] sm:$0xf] %v215
                %v217 = vld [vmem:[%s209 + $0xc] sm:$0xf]
                %218 = vst [vmem:[%s210 + $0xc] sm:$0xf] %v217
                %v219 = vld [vmem:[%s209 + $0x10] sm:$0xf]
                %220 = vst [vmem:[%s210 + $0x10] sm:$0xf] %v219
                %v221 = vld [vmem:[%s209 + $0x14] sm:$0xf]
                %222 = vst [vmem:[%s210 + $0x14] sm:$0xf] %v221
                %v223 = vld [vmem:[%s209 + $0x18] sm:$0xf]
                %224 = vst [vmem:[%s210 + $0x18] sm:$0xf] %v223
                %v225 = vld [vmem:[%s209 + $0x1c] sm:$0xf]
                %226 = vst [vmem:[%s210 + $0x1c] sm:$0xf] %v225
                %v227 = vld [vmem:[%s209 + $0x90] sm:$0xf]
                %228 = vst [vmem:[%s210 + $0x20] sm:$0xf] %v227
                %v229 = vld [vmem:[%s209 + $0x94] sm:$0xf]
                %230 = vst [vmem:[%s210 + $0x24] sm:$0xf] %v229
                %v231 = vld [vmem:[%s209 + $0x98] sm:$0xf]
                %232 = vst [vmem:[%s210 + $0x28] sm:$0xf] %v231
                %v233 = vld [vmem:[%s209 + $0x9c] sm:$0xf]
                %234 = vst [vmem:[%s210 + $0x2c] sm:$0xf] %v233
                %v235 = vld [vmem:[%s209 + $0xa0] sm:$0xf]
                %236 = vst [vmem:[%s210 + $0x30] sm:$0xf] %v235
                %v237 = vld [vmem:[%s209 + $0xa4] sm:$0xf]
                %238 = vst [vmem:[%s210 + $0x34] sm:$0xf] %v237
                %v239 = vld [vmem:[%s209 + $0xa8] sm:$0xf]
                %240 = vst [vmem:[%s210 + $0x38] sm:$0xf] %v239
                %v241 = vld [vmem:[%s209 + $0xac] sm:$0xf]
                %242 = vst [vmem:[%s210 + $0x3c] sm:$0xf] %v241
                %v243 = vld [vmem:[%s209 + $0x120] sm:$0xf]
                %244 = vst [vmem:[%s210 + $0x40] sm:$0xf] %v243
                %v245 = vld [vmem:[%s209 + $0x124] sm:$0xf]
                %246 = vst [vmem:[%s210 + $0x44] sm:$0xf] %v245
                %v247 = vld [vmem:[%s209 + $0x128] sm:$0xf]
                %248 = vst [vmem:[%s210 + $0x48] sm:$0xf] %v247
                %v249 = vld [vmem:[%s209 + $0x12c] sm:$0xf]
                %250 = vst [vmem:[%s210 + $0x4c] sm:$0xf] %v249
                %v251 = vld [vmem:[%s209 + $0x130] sm:$0xf]
                %252 = vst [vmem:[%s210 + $0x50] sm:$0xf] %v251
                %v253 = vld [vmem:[%s209 + $0x134] sm:$0xf]
                %254 = vst [vmem:[%s210 + $0x54] sm:$0xf] %v253
                %v255 = vld [vmem:[%s209 + $0x138] sm:$0xf]
                %256 = vst [vmem:[%s210 + $0x58] sm:$0xf] %v255
                %v257 = vld [vmem:[%s209 + $0x13c] sm:$0xf]
                %258 = vst [vmem:[%s210 + $0x5c] sm:$0xf] %v257
                %v259 = vld [vmem:[%s209 + $0x1b0] sm:$0xf]
                %260 = vst [vmem:[%s210 + $0x60] sm:$0xf] %v259
                %v261 = vld [vmem:[%s209 + $0x1b4] sm:$0xf]
                %262 = vst [vmem:[%s210 + $0x64] sm:$0xf] %v261
                %v263 = vld [vmem:[%s209 + $0x1b8] sm:$0xf]
                %264 = vst [vmem:[%s210 + $0x68] sm:$0xf] %v263
                %v265 = vld [vmem:[%s209 + $0x1bc] sm:$0xf]
                %266 = vst [vmem:[%s210 + $0x6c] sm:$0xf] %v265
                %v267 = vld [vmem:[%s209 + $0x1c0] sm:$0xf]
                %268 = vst [vmem:[%s210 + $0x70] sm:$0xf] %v267
                %v269 = vld [vmem:[%s209 + $0x1c4] sm:$0xf]
                %270 = vst [vmem:[%s210 + $0x74] sm:$0xf] %v269
                %v271 = vld [vmem:[%s209 + $0x1c8] sm:$0xf]
                %272 = vst [vmem:[%s210 + $0x78] sm:$0xf] %v271
                %v273 = vld [vmem:[%s209 + $0x1cc] sm:$0xf]
                %274 = vst [vmem:[%s210 + $0x7c] sm:$0xf] %v273
                %s275 = sadd.s32 1, %s208
                %p276 = scmp.ge.s32.totalorder %s275, %s201
                %s277 = scalar_select %p276, 0, %s275
                %s278 = smul.u32 %s277, 32
                %s279 = smul.u32 %s277, 32
                %s280 = scalar_lea.vmem %s191, %s278
                %s281 = scalar_lea.vmem %s179, %s279 [#allocation3]
              $region45: #{_conv2d_depthwise.1} parent=39 // loop_footer
                %s205 = sadd.s32 %s203, 1
              $region46: #{_conv2d_depthwise.1} parent=39 // loop_footer_branch
                %202 = sbr.rel target = $region42
              $region47: #{_conv2d_depthwise.1} parent=39 // loop_exit
                _
              %s282 = sshrl.u32 %s192, 3
              %s283 = sand.u32 %s192, 7
              %s284 = smul.u32 %s282, 8
              %s285 = smul.u32 4, %s284
              %s286 = scalar_lea.vmem %s191, %s285
              %s287 = smul.u32 4, %s284
              %s288 = scalar_lea.vmem %s179, %s287 [#allocation3]
              // While loop
              $region48: #{_conv2d_depthwise.1} parent=39 // loop_pre_header
                _
              $region49: #{_conv2d_depthwise.1} parent=39 // loop_header
                %s290 = sphi 0, %s292
                %p291 = scmp.ge.s32.totalorder %s290, %s283
                %s295 = sphi 0, %s308
                %s296 = sphi %s286, %s311
                %s297 = sphi %s288, %s312
              $region50: #{_conv2d_depthwise.1} parent=39 // loop_header_branch
                %294 = sbr.rel (%p291) target = $region54
              $region51: #{_conv2d_depthwise.1} parent=39 // loop_body
                %v298 = vld [vmem:[%s296] sm:$0xf]
                %299 = vst [vmem:[%s297] sm:$0xf] %v298
                %v300 = vld [vmem:[%s296 + $0x90] sm:$0xf]
                %301 = vst [vmem:[%s297 + $0x20] sm:$0xf] %v300
                %v302 = vld [vmem:[%s296 + $0x120] sm:$0xf]
                %303 = vst [vmem:[%s297 + $0x40] sm:$0xf] %v302
                %v304 = vld [vmem:[%s296 + $0x1b0] sm:$0xf]
                %305 = vst [vmem:[%s297 + $0x60] sm:$0xf] %v304
                %s306 = sadd.s32 1, %s295
                %p307 = scmp.ge.s32.totalorder %s306, %s283
                %s308 = scalar_select %p307, 0, %s306
                %s309 = smul.u32 %s308, 4
                %s310 = smul.u32 %s308, 4
                %s311 = scalar_lea.vmem %s286, %s309
                %s312 = scalar_lea.vmem %s288, %s310 [#allocation3]
              $region52: #{_conv2d_depthwise.1} parent=39 // loop_footer
                %s292 = sadd.s32 %s290, 1
              $region53: #{_conv2d_depthwise.1} parent=39 // loop_footer_branch
                %289 = sbr.rel target = $region49
              $region54: #{_conv2d_depthwise.1} parent=39 // loop_exit
                _
            $region40: #{_conv2d_depthwise.1} parent=31 // pred_fallthru
              _
          $region32: #{_conv2d_depthwise.1} parent=27 // pred_fallthru
            _
          %468 = vnop
        $region28: #{_conv2d_depthwise.1} parent=23 // pred_fallthru
          _
        // Predicated region
        $region87: #{_conv2d_depthwise.1} parent=23 // pred_check
          %p469 = pneg %p72
        $region88: #{_conv2d_depthwise.1} parent=23 // pred_check_branch
          %471 = sbr.rel (%p469) target = $region90
        $region89: #{_conv2d_depthwise.1} parent=23 // pred_region
          %s472 = sand.u32 %s62, 1
          %s473 = sand.u32 %s62, 1
          %s474 = smul.addr %s473, 32
          %s475 = scalar_lea.vmem [#allocation4], %s474
          %s476 = smul.addr %s18, 2
          %s477 = smul.addr %s17, 4
          %s478 = sadd.s32 %s476, %s477
          %s479 = smul.addr %s478, 4
          %s480 = scalar_lea.vmem %s1, %s479
          // Predicated region
          $region91: #{_conv2d_depthwise.1} parent=89 // pred_check
            _
          $region92: #{_conv2d_depthwise.1} parent=89 // pred_check_branch
            %482 = sbr.rel (0) target = $region94
          $region93: #{_conv2d_depthwise.1} parent=89 // pred_region
            // Predicated region
            $region95: #{_conv2d_depthwise.1} parent=93 // pred_check
              _
            $region96: #{_conv2d_depthwise.1} parent=93 // pred_check_branch
              %484 = sbr.rel target = $region98
            $region97: #{_conv2d_depthwise.1} parent=93 // pred_region
              // Predicated region
              $region110: #{_conv2d_depthwise.1} parent=97 // pred_check
                _
              $region111: #{_conv2d_depthwise.1} parent=97 // pred_check_branch
                %513 = sbr.rel (0) target = $region113
              $region112: #{_conv2d_depthwise.1} parent=97 // pred_region
                loop: start=0, step=1, limit=1
                $region114: #{_conv2d_depthwise.1} parent=112 // loop_pre_header
                  _
                $region115: #{_conv2d_depthwise.1} parent=112 // loop_header
                  %s515 = sphi 0, %s519
                  %p516 = scmp.ge.s32.totalorder %s515, 1
                  %s520 = sphi %s480, %s480
                  %s521 = sphi %s475, %s475
                $region116: #{_conv2d_depthwise.1} parent=112 // loop_header_branch
                  %518 = sbr.rel (%p516) target = $region120
                $region117: #{_conv2d_depthwise.1} parent=112 // loop_body
                  _
                $region118: #{_conv2d_depthwise.1} parent=112 // loop_footer
                  %s519 = sadd.s32 1, %s515
                $region119: #{_conv2d_depthwise.1} parent=112 // loop_footer_branch
                  %514 = sbr.rel target = $region115
                $region120: #{_conv2d_depthwise.1} parent=112 // loop_exit
                  _
                loop: start=0, step=1, limit=1
                $region121: #{_conv2d_depthwise.1} parent=112 // loop_pre_header
                  _
                $region122: #{_conv2d_depthwise.1} parent=112 // loop_header
                  %s524 = sphi 0, %s528
                  %p525 = scmp.ge.s32.totalorder %s524, 1
                  %s529 = sphi %s480, %s480
                  %s530 = sphi %s475, %s475
                $region123: #{_conv2d_depthwise.1} parent=112 // loop_header_branch
                  %527 = sbr.rel (%p525) target = $region127
                $region124: #{_conv2d_depthwise.1} parent=112 // loop_body
                  %v531 = vld [vmem:[%s529] sm:$0xf]
                  %532 = vst [vmem:[%s530] sm:$0xf] %v531
                  %v533 = vld [vmem:[%s529 + $0x4] sm:$0xf]
                  %534 = vst [vmem:[%s530 + $0x4] sm:$0xf] %v533
                  %v535 = vld [vmem:[%s529 + $0x20] sm:$0xf]
                  %536 = vst [vmem:[%s530 + $0x8] sm:$0xf] %v535
                  %v537 = vld [vmem:[%s529 + $0x24] sm:$0xf]
                  %538 = vst [vmem:[%s530 + $0xc] sm:$0xf] %v537
                  %v539 = vld [vmem:[%s529 + $0x40] sm:$0xf]
                  %540 = vst [vmem:[%s530 + $0x10] sm:$0xf] %v539
                  %v541 = vld [vmem:[%s529 + $0x44] sm:$0xf]
                  %542 = vst [vmem:[%s530 + $0x14] sm:$0xf] %v541
                  %v543 = vld [vmem:[%s529 + $0x60] sm:$0xf]
                  %544 = vst [vmem:[%s530 + $0x18] sm:$0xf] %v543
                  %v545 = vld [vmem:[%s529 + $0x64] sm:$0xf]
                  %546 = vst [vmem:[%s530 + $0x1c] sm:$0xf] %v545
                $region125: #{_conv2d_depthwise.1} parent=112 // loop_footer
                  %s528 = sadd.s32 1, %s524
                $region126: #{_conv2d_depthwise.1} parent=112 // loop_footer_branch
                  %523 = sbr.rel target = $region122
                $region127: #{_conv2d_depthwise.1} parent=112 // loop_exit
                  _
              $region113: #{_conv2d_depthwise.1} parent=97 // pred_fallthru
                _
            $region98: #{_conv2d_depthwise.1} parent=93 // pred_fallthru
              _
            // Predicated region
            $region99: #{_conv2d_depthwise.1} parent=93 // pred_check
              _
            $region100: #{_conv2d_depthwise.1} parent=93 // pred_check_branch
              %486 = sbr.rel (0) target = $region102
            $region101: #{_conv2d_depthwise.1} parent=93 // pred_region
              loop: start=0, step=1, limit=1
              $region103: #{_conv2d_depthwise.1} parent=101 // loop_pre_header
                _
              $region104: #{_conv2d_depthwise.1} parent=101 // loop_header
                %s489 = sphi 0, %s493
                %p490 = scmp.ge.s32.totalorder %s489, 1
                %s494 = sphi %s480, %s480
                %s495 = sphi %s475, %s475
              $region105: #{_conv2d_depthwise.1} parent=101 // loop_header_branch
                %492 = sbr.rel (%p490) target = $region109
              $region106: #{_conv2d_depthwise.1} parent=101 // loop_body
                %v496 = vld [vmem:[%s494] sm:$0xf]
                %497 = vst [vmem:[%s495] sm:$0xf] %v496
                %v498 = vld [vmem:[%s494 + $0x4] sm:$0xf]
                %499 = vst [vmem:[%s495 + $0x4] sm:$0xf] %v498
                %v500 = vld [vmem:[%s494 + $0x20] sm:$0xf]
                %501 = vst [vmem:[%s495 + $0x8] sm:$0xf] %v500
                %v502 = vld [vmem:[%s494 + $0x24] sm:$0xf]
                %503 = vst [vmem:[%s495 + $0xc] sm:$0xf] %v502
                %v504 = vld [vmem:[%s494 + $0x40] sm:$0xf]
                %505 = vst [vmem:[%s495 + $0x10] sm:$0xf] %v504
                %v506 = vld [vmem:[%s494 + $0x44] sm:$0xf]
                %507 = vst [vmem:[%s495 + $0x14] sm:$0xf] %v506
                %v508 = vld [vmem:[%s494 + $0x60] sm:$0xf]
                %509 = vst [vmem:[%s495 + $0x18] sm:$0xf] %v508
                %v510 = vld [vmem:[%s494 + $0x64] sm:$0xf]
                %511 = vst [vmem:[%s495 + $0x1c] sm:$0xf] %v510
              $region107: #{_conv2d_depthwise.1} parent=101 // loop_footer
                %s493 = sadd.s32 1, %s489
              $region108: #{_conv2d_depthwise.1} parent=101 // loop_footer_branch
                %488 = sbr.rel target = $region104
              $region109: #{_conv2d_depthwise.1} parent=101 // loop_exit
                _
            $region102: #{_conv2d_depthwise.1} parent=93 // pred_fallthru
              _
          $region94: #{_conv2d_depthwise.1} parent=89 // pred_fallthru
            _
          %547 = vnop
        $region90: #{_conv2d_depthwise.1} parent=23 // pred_fallthru
          _
      $region24: #{_conv2d_depthwise.1} parent=5 // pred_fallthru
        _
      %p548 = scmp.le.s32.totalorder 1, %s10
      %p549 = scmp.lt.s32.totalorder %s10, 5
      %p550 = pnand %p548, %p549
      %p551 = pneg %p550
      // Predicated region
      $region128: #{_conv2d_depthwise.1} parent=5 // pred_check
        _
      $region129: #{_conv2d_depthwise.1} parent=5 // pred_check_branch
        %553 = sbr.rel (%p550) target = $region131
      $region130: #{_conv2d_depthwise.1} parent=5 // pred_region
        %s554 = ssub.s32 %s10, 1
        %s555 = sand.u32 %s37, 1
        %s556 = sand.u32 %s37, 1
        %s557 = smul.addr %s556, 128
        %s558 = scalar_lea.vmem [#allocation3], %s557
        // Predicated region
        $region132: #{_conv2d_depthwise.1} parent=130 // pred_check
          %p559 = pneg %p50
        $region133: #{_conv2d_depthwise.1} parent=130 // pred_check_branch
          %561 = sbr.rel (%p559) target = $region135
        $region134: #{_conv2d_depthwise.1} parent=130 // pred_region
          _
        $region135: #{_conv2d_depthwise.1} parent=130 // pred_fallthru
          _
        %s562 = sand.u32 %s65, 1
        %s563 = sand.u32 %s65, 1
        %s564 = smul.addr %s563, 32
        %s565 = scalar_lea.vmem [#allocation4], %s564
        // Predicated region
        $region136: #{_conv2d_depthwise.1} parent=130 // pred_check
          %p566 = pneg %p78
        $region137: #{_conv2d_depthwise.1} parent=130 // pred_check_branch
          %568 = sbr.rel (%p566) target = $region139
        $region138: #{_conv2d_depthwise.1} parent=130 // pred_region
          _
        $region139: #{_conv2d_depthwise.1} parent=130 // pred_fallthru
          _
        %s569 = sand.u32 %s37, 1
        %s570 = sand.u32 %s37, 1
        %s571 = smul.addr %s570, 128
        %s572 = scalar_lea.vmem [#allocation3], %s571
        %p573 = pneg %p50
        %p574 = pneg %p47
        %s575 = sand.u32 %s65, 1
        %s576 = sand.u32 %s65, 1
        %s577 = smul.addr %s576, 32
        %s578 = scalar_lea.vmem [#allocation4], %s577
        %p579 = pneg %p78
        %p580 = pneg %p75
        %p581 = pneg %p99
        %p582 = pneg %p96
        %p583 = pneg %p120
        %p584 = pneg %p117
        %p585 = pneg %p148
        %p586 = pneg %p145
        %s587 = smul.u32 4, %s20
        %p588 = scmp.lt.s32.totalorder %s19, 1
        %s589 = scalar_select %p588, %s19, 1
        %p590 = scmp.lt.s32.totalorder %s587, 7
        %s591 = scalar_select %p590, %s587, 7
        %s592 = smul.addr %s589, 8
        %s593 = sadd.s32 %s591, %s592
        %s594 = smul.addr %s593, 8
        %s595 = scalar_lea.vmem %s4, %s594
        %s596 = smul.u32 4, %s20
        %s597 = ssub.s32 9, %s596
        %p598 = scmp.lt.s32.totalorder %s597, 4
        %s599 = scalar_select %p598, %s597, 4
        %s600 = smul.u32 256, %s599
        %s601 = smul.u32 %s600, 2
        %s602 = smul.u32 4, %s20
        %p603 = scmp.lt.s32.totalorder %s19, 1
        %s604 = scalar_select %p603, %s19, 1
        %p605 = scmp.lt.s32.totalorder %s602, 7
        %s606 = scalar_select %p605, %s602, 7
        %s607 = smul.addr %s604, 8
        %s608 = sadd.s32 %s606, %s607
        %s609 = smul.addr %s608, 8
        %s610 = scalar_lea.vmem %s4, %s609
        %s611 = smul.u32 4, %s20
        %v612 = vld [vmem:[%s558] sm:$0xf]
        %v613 = vld [vmem:[%s558 + $0x4] sm:$0x1]
        %v614 = vld [vmem:[%s558 + $0x8] sm:$0xf]
        %v615 = vld [vmem:[%s558 + $0xc] sm:$0x1]
        %v616 = vld [vmem:[%s558 + $0x10] sm:$0xf]
        %v617 = vld [vmem:[%s558 + $0x14] sm:$0x1]
        %v618 = vld [vmem:[%s558 + $0x18] sm:$0xf]
        %v619 = vld [vmem:[%s558 + $0x1c] sm:$0x1]
        %v620 = vld [vmem:[%s558 + $0x20] sm:$0xf]
        %v621 = vld [vmem:[%s558 + $0x24] sm:$0x1]
        %v622 = vld [vmem:[%s558 + $0x28] sm:$0xf]
        %v623 = vld [vmem:[%s558 + $0x2c] sm:$0x1]
        %v624 = vld [vmem:[%s558 + $0x30] sm:$0xf]
        %v625 = vld [vmem:[%s558 + $0x34] sm:$0x1]
        %v626 = vld [vmem:[%s558 + $0x38] sm:$0xf]
        %v627 = vld [vmem:[%s558 + $0x3c] sm:$0x1]
        %v628 = vld [vmem:[%s558 + $0x40] sm:$0xf]
        %v629 = vld [vmem:[%s558 + $0x44] sm:$0x1]
        %v630 = vld [vmem:[%s558 + $0x48] sm:$0xf]
        %v631 = vld [vmem:[%s558 + $0x4c] sm:$0x1]
        %v632 = vld [vmem:[%s558 + $0x50] sm:$0xf]
        %v633 = vld [vmem:[%s558 + $0x54] sm:$0x1]
        %v634 = vld [vmem:[%s558 + $0x58] sm:$0xf]
        %v635 = vld [vmem:[%s558 + $0x5c] sm:$0x1]
        %v636 = vld [vmem:[%s558 + $0x60] sm:$0xf]
        %v637 = vld [vmem:[%s558 + $0x64] sm:$0x1]
        %v638 = vld [vmem:[%s558 + $0x68] sm:$0xf]
        %v639 = vld [vmem:[%s558 + $0x6c] sm:$0x1]
        %v640 = vld [vmem:[%s558 + $0x70] sm:$0xf]
        %v641 = vld [vmem:[%s558 + $0x74] sm:$0x1]
        %v642 = vld [vmem:[%s558 + $0x78] sm:$0xf]
        %v643 = vld [vmem:[%s558 + $0x7c] sm:$0x1]
        %vm644 = vcmask 27648
        %645 = vst.msk [vmem:[#allocation2] sm:$0xf] %vm644, %v612
        %vm646 = vcmask 24576
        %vm647 = vsmask.f32 256
        %vm648 = vmand %vm646, %vm647
        %v649 = vld [vmem:[#allocation2 + $0x4] sm:$0x1]
        %v650 = vsel %vm648, %v613, %v649
        %651 = vst [vmem:[#allocation2 + $0x4] sm:$0x1] %v650
        %652 = vst.msk [vmem:[#allocation2 + $0x8] sm:$0xf] %vm644, %v614
        %v653 = vld [vmem:[#allocation2 + $0xc] sm:$0x1]
        %v654 = vsel %vm648, %v615, %v653
        %655 = vst [vmem:[#allocation2 + $0xc] sm:$0x1] %v654
        %656 = vst.msk [vmem:[#allocation2 + $0x10] sm:$0xf] %vm644, %v616
        %v657 = vld [vmem:[#allocation2 + $0x14] sm:$0x1]
        %v658 = vsel %vm648, %v617, %v657
        %659 = vst [vmem:[#allocation2 + $0x14] sm:$0x1] %v658
        %660 = vst.msk [vmem:[#allocation2 + $0x18] sm:$0xf] %vm644, %v618
        %v661 = vld [vmem:[#allocation2 + $0x1c] sm:$0x1]
        %v662 = vsel %vm648, %v619, %v661
        %663 = vst [vmem:[#allocation2 + $0x1c] sm:$0x1] %v662
        %664 = vst.msk [vmem:[#allocation2 + $0x28] sm:$0xf] %vm644, %v620
        %v665 = vld [vmem:[#allocation2 + $0x2c] sm:$0x1]
        %v666 = vsel %vm648, %v621, %v665
        %667 = vst [vmem:[#allocation2 + $0x2c] sm:$0x1] %v666
        %668 = vst.msk [vmem:[#allocation2 + $0x30] sm:$0xf] %vm644, %v622
        %v669 = vld [vmem:[#allocation2 + $0x34] sm:$0x1]
        %v670 = vsel %vm648, %v623, %v669
        %671 = vst [vmem:[#allocation2 + $0x34] sm:$0x1] %v670
        %672 = vst.msk [vmem:[#allocation2 + $0x38] sm:$0xf] %vm644, %v624
        %v673 = vld [vmem:[#allocation2 + $0x3c] sm:$0x1]
        %v674 = vsel %vm648, %v625, %v673
        %675 = vst [vmem:[#allocation2 + $0x3c] sm:$0x1] %v674
        %676 = vst.msk [vmem:[#allocation2 + $0x40] sm:$0xf] %vm644, %v626
        %v677 = vld [vmem:[#allocation2 + $0x44] sm:$0x1]
        %v678 = vsel %vm648, %v627, %v677
        %679 = vst [vmem:[#allocation2 + $0x44] sm:$0x1] %v678
        %680 = vst.msk [vmem:[#allocation2 + $0x50] sm:$0xf] %vm644, %v628
        %v681 = vld [vmem:[#allocation2 + $0x54] sm:$0x1]
        %v682 = vsel %vm648, %v629, %v681
        %683 = vst [vmem:[#allocation2 + $0x54] sm:$0x1] %v682
        %684 = vst.msk [vmem:[#allocation2 + $0x58] sm:$0xf] %vm644, %v630
        %v685 = vld [vmem:[#allocation2 + $0x5c] sm:$0x1]
        %v686 = vsel %vm648, %v631, %v685
        %687 = vst [vmem:[#allocation2 + $0x5c] sm:$0x1] %v686
        %688 = vst.msk [vmem:[#allocation2 + $0x60] sm:$0xf] %vm644, %v632
        %v689 = vld [vmem:[#allocation2 + $0x64] sm:$0x1]
        %v690 = vsel %vm648, %v633, %v689
        %691 = vst [vmem:[#allocation2 + $0x64] sm:$0x1] %v690
        %692 = vst.msk [vmem:[#allocation2 + $0x68] sm:$0xf] %vm644, %v634
        %v693 = vld [vmem:[#allocation2 + $0x6c] sm:$0x1]
        %v694 = vsel %vm648, %v635, %v693
        %695 = vst [vmem:[#allocation2 + $0x6c] sm:$0x1] %v694
        %696 = vst.msk [vmem:[#allocation2 + $0x78] sm:$0xf] %vm644, %v636
        %v697 = vld [vmem:[#allocation2 + $0x7c] sm:$0x1]
        %v698 = vsel %vm648, %v637, %v697
        %699 = vst [vmem:[#allocation2 + $0x7c] sm:$0x1] %v698
        %700 = vst.msk [vmem:[#allocation2 + $0x80] sm:$0xf] %vm644, %v638
        %v701 = vld [vmem:[#allocation2 + $0x84] sm:$0x1]
        %v702 = vsel %vm648, %v639, %v701
        %703 = vst [vmem:[#allocation2 + $0x84] sm:$0x1] %v702
        %704 = vst.msk [vmem:[#allocation2 + $0x88] sm:$0xf] %vm644, %v640
        %v705 = vld [vmem:[#allocation2 + $0x8c] sm:$0x1]
        %v706 = vsel %vm648, %v641, %v705
        %707 = vst [vmem:[#allocation2 + $0x8c] sm:$0x1] %v706
        %708 = vst.msk [vmem:[#allocation2 + $0x90] sm:$0xf] %vm644, %v642
        %v709 = vld [vmem:[#allocation2 + $0x94] sm:$0x1]
        %v710 = vsel %vm648, %v643, %v709
        %711 = vst [vmem:[#allocation2 + $0x94] sm:$0x1] %v710
        %v712 = vld [vmem:[%s565] sm:$0xf]
        %v713 = vld [vmem:[%s565 + $0x4] sm:$0x1]
        %v714 = vld [vmem:[%s565 + $0x8] sm:$0xf]
        %v715 = vld [vmem:[%s565 + $0xc] sm:$0x1]
        %v716 = vld [vmem:[%s565 + $0x10] sm:$0xf]
        %v717 = vld [vmem:[%s565 + $0x14] sm:$0x1]
        %v718 = vld [vmem:[%s565 + $0x18] sm:$0xf]
        %v719 = vld [vmem:[%s565 + $0x1c] sm:$0x1]
        %s720 = scalar_lea.vmem [#allocation2], 32
        %721 = vst.msk [vmem:[%s720] sm:$0xf] %vm644, %v712
        %v722 = vld [vmem:[%s720 + $0x4] sm:$0x1]
        %v723 = vsel %vm648, %v713, %v722
        %724 = vst [vmem:[%s720 + $0x4] sm:$0x1] %v723
        %725 = vst.msk [vmem:[%s720 + $0x28] sm:$0xf] %vm644, %v714
        %v726 = vld [vmem:[%s720 + $0x2c] sm:$0x1]
        %v727 = vsel %vm648, %v715, %v726
        %728 = vst [vmem:[%s720 + $0x2c] sm:$0x1] %v727
        %729 = vst.msk [vmem:[%s720 + $0x50] sm:$0xf] %vm644, %v716
        %v730 = vld [vmem:[%s720 + $0x54] sm:$0x1]
        %v731 = vsel %vm648, %v717, %v730
        %732 = vst [vmem:[%s720 + $0x54] sm:$0x1] %v731
        %733 = vst.msk [vmem:[%s720 + $0x78] sm:$0xf] %vm644, %v718
        %v734 = vld [vmem:[%s720 + $0x7c] sm:$0x1]
        %v735 = vsel %vm648, %v719, %v734
        %736 = vst [vmem:[%s720 + $0x7c] sm:$0x1] %v735
        %v737 = vld [vmem:[#allocation2] sm:$0xf]
        %v738 = vld [vmem:[#allocation2 + $0x8] sm:$0xf]
        %v739 = vld [vmem:[#allocation2 + $0x10] sm:$0xf]
        %v740 = vld [vmem:[#allocation2 + $0x18] sm:$0xf]
        %v741 = vunpack.c.l.bf16 %v737
        %v742 = vunpack.c.l.bf16 %v738
        %v743 = vunpack.c.l.bf16 %v739
        %v744 = vunpack.c.l.bf16 %v740
        %v745 = vld [vmem:[%s2] sm:$0x1]
        %v746 = vunpack.c.l.bf16 %v745
        %v747 = vlaneseq
        %v748 = vshrl.u32 %v747, 7
        %v749 = vsub.s32 0, %v748
        %v750 = vrot.slane %v746, %v749
        %v751 = vmul.f32 %v741, %v750
        %v752 = vmul.f32 %v742, %v750
        %v753 = vmul.f32 %v743, %v750
        %v754 = vmul.f32 %v744, %v750
        %v755 = vadd.f32 %v751, 0.0
        %v756 = vadd.f32 %v752, 0.0
        %v757 = vadd.f32 %v753, 0.0
        %v758 = vadd.f32 %v754, 0.0
        %s759 = scalar_lea.vmem [#allocation2], 40
        %v760 = vld [vmem:[%s759] sm:$0xf]
        %v761 = vld [vmem:[%s759 + $0x8] sm:$0xf]
        %v762 = vld [vmem:[%s759 + $0x10] sm:$0xf]
        %v763 = vld [vmem:[%s759 + $0x18] sm:$0xf]
        %v764 = vunpack.c.l.bf16 %v760
        %v765 = vunpack.c.l.bf16 %v761
        %v766 = vunpack.c.l.bf16 %v762
        %v767 = vunpack.c.l.bf16 %v763
        %v768 = vlaneseq
        %v769 = vshrl.u32 %v768, 7
        %v770 = vsub.s32 1, %v769
        %v771 = vrot.slane %v746, %v770
        %v772 = vmul.f32 %v764, %v771
        %v773 = vmul.f32 %v765, %v771
        %v774 = vmul.f32 %v766, %v771
        %v775 = vmul.f32 %v767, %v771
        %v776 = vadd.f32 %v755, %v772
        %v777 = vadd.f32 %v756, %v773
        %v778 = vadd.f32 %v757, %v774
        %v779 = vadd.f32 %v758, %v775
        %v780 = vld [vmem:[#allocation2 + $0x4] sm:$0x1]
        %v781 = vld [vmem:[#allocation2 + $0xc] sm:$0x1]
        %v782 = vld [vmem:[#allocation2 + $0x14] sm:$0x1]
        %v783 = vld [vmem:[#allocation2 + $0x1c] sm:$0x1]
        %v784 = vunpack.c.l.bf16 %v780
        %v785 = vunpack.c.l.bf16 %v781
        %v786 = vunpack.c.l.bf16 %v782
        %v787 = vunpack.c.l.bf16 %v783
        %v788 = vld [vmem:[%s2] sm:$0x2]
        %v789 = vunpack.c.l.bf16 %v788
        %v790 = vlaneseq
        %v791 = vshrl.u32 %v790, 7
        %v792 = vsub.s32 2, %v791
        %v793 = vrot.slane %v789, %v792
        %v794 = vmul.f32 %v741, %v793
        %v795 = vmul.f32 %v784, %v793
        %v796 = vmul.f32 %v742, %v793
        %v797 = vmul.f32 %v785, %v793
        %v798 = vmul.f32 %v743, %v793
        %v799 = vmul.f32 %v786, %v793
        %v800 = vmul.f32 %v744, %v793
        %v801 = vmul.f32 %v787, %v793
        %vm810 = vcmask 1046528
        %v811 = vrot.slane %v794, 1
        %v812 = vrot.slane %v795, 1
        %v813 = vsel %vm810, %v811, %v812
        %v814 = vrot.slane %v796, 1
        %v815 = vrot.slane %v797, 1
        %v816 = vsel %vm810, %v814, %v815
        %v817 = vrot.slane %v798, 1
        %v818 = vrot.slane %v799, 1
        %v819 = vsel %vm810, %v817, %v818
        %v820 = vrot.slane %v800, 1
        %v821 = vrot.slane %v801, 1
        %v822 = vsel %vm810, %v820, %v821
        %v827 = vadd.f32 %v776, %v813
        %v828 = vadd.f32 %v777, %v816
        %v829 = vadd.f32 %v778, %v819
        %v830 = vadd.f32 %v779, %v822
        %s831 = scalar_lea.vmem [#allocation2], 80
        %v832 = vld [vmem:[%s831] sm:$0xf]
        %v833 = vld [vmem:[%s831 + $0x8] sm:$0xf]
        %v834 = vld [vmem:[%s831 + $0x10] sm:$0xf]
        %v835 = vld [vmem:[%s831 + $0x18] sm:$0xf]
        %v836 = vunpack.c.l.bf16 %v832
        %v837 = vunpack.c.l.bf16 %v833
        %v838 = vunpack.c.l.bf16 %v834
        %v839 = vunpack.c.l.bf16 %v835
        %v840 = vlaneseq
        %v841 = vshrl.u32 %v840, 7
        %v842 = vsub.s32 3, %v841
        %v843 = vrot.slane %v789, %v842
        %v844 = vmul.f32 %v836, %v843
        %v845 = vmul.f32 %v837, %v843
        %v846 = vmul.f32 %v838, %v843
        %v847 = vmul.f32 %v839, %v843
        %v848 = vadd.f32 %v827, %v844
        %v849 = vadd.f32 %v828, %v845
        %v850 = vadd.f32 %v829, %v846
        %v851 = vadd.f32 %v830, %v847
        %s852 = scalar_lea.vmem [#allocation2], 120
        %v853 = vld [vmem:[%s852] sm:$0xf]
        %v854 = vld [vmem:[%s852 + $0x8] sm:$0xf]
        %v855 = vld [vmem:[%s852 + $0x10] sm:$0xf]
        %v856 = vld [vmem:[%s852 + $0x18] sm:$0xf]
        %v857 = vunpack.c.l.bf16 %v853
        %v858 = vunpack.c.l.bf16 %v854
        %v859 = vunpack.c.l.bf16 %v855
        %v860 = vunpack.c.l.bf16 %v856
        %v861 = vld [vmem:[%s2] sm:$0x4]
        %v862 = vunpack.c.l.bf16 %v861
        %v863 = vlaneseq
        %v864 = vshrl.u32 %v863, 7
        %v865 = vsub.s32 4, %v864
        %v866 = vrot.slane %v862, %v865
        %v867 = vmul.f32 %v857, %v866
        %v868 = vmul.f32 %v858, %v866
        %v869 = vmul.f32 %v859, %v866
        %v870 = vmul.f32 %v860, %v866
        %v871 = vadd.f32 %v848, %v867
        %v872 = vadd.f32 %v849, %v868
        %v873 = vadd.f32 %v850, %v869
        %v874 = vadd.f32 %v851, %v870
        %v875 = vld [vmem:[%s831 + $0x4] sm:$0x1]
        %v876 = vld [vmem:[%s831 + $0xc] sm:$0x1]
        %v877 = vld [vmem:[%s831 + $0x14] sm:$0x1]
        %v878 = vld [vmem:[%s831 + $0x1c] sm:$0x1]
        %v879 = vunpack.c.l.bf16 %v875
        %v880 = vunpack.c.l.bf16 %v876
        %v881 = vunpack.c.l.bf16 %v877
        %v882 = vunpack.c.l.bf16 %v878
        %v883 = vlaneseq
        %v884 = vshrl.u32 %v883, 7
        %v885 = vsub.s32 5, %v884
        %v886 = vrot.slane %v862, %v885
        %v887 = vmul.f32 %v836, %v886
        %v888 = vmul.f32 %v879, %v886
        %v889 = vmul.f32 %v837, %v886
        %v890 = vmul.f32 %v880, %v886
        %v891 = vmul.f32 %v838, %v886
        %v892 = vmul.f32 %v881, %v886
        %v893 = vmul.f32 %v839, %v886
        %v894 = vmul.f32 %v882, %v886
        %v903 = vrot.slane %v887, 1
        %v904 = vrot.slane %v888, 1
        %v905 = vsel %vm810, %v903, %v904
        %v906 = vrot.slane %v889, 1
        %v907 = vrot.slane %v890, 1
        %v908 = vsel %vm810, %v906, %v907
        %v909 = vrot.slane %v891, 1
        %v910 = vrot.slane %v892, 1
        %v911 = vsel %vm810, %v909, %v910
        %v912 = vrot.slane %v893, 1
        %v913 = vrot.slane %v894, 1
        %v914 = vsel %vm810, %v912, %v913
        %v919 = vadd.f32 %v871, %v905
        %v920 = vadd.f32 %v872, %v908
        %v921 = vadd.f32 %v873, %v911
        %v922 = vadd.f32 %v874, %v914
        %s923 = scalar_lea.vmem [#allocation2], 8
        %v924 = vld [vmem:[%s923] sm:$0xf]
        %v925 = vld [vmem:[%s923 + $0x8] sm:$0xf]
        %v926 = vld [vmem:[%s923 + $0x10] sm:$0xf]
        %v927 = vld [vmem:[%s923 + $0x18] sm:$0xf]
        %v928 = vunpack.c.l.bf16 %v924
        %v929 = vunpack.c.l.bf16 %v925
        %v930 = vunpack.c.l.bf16 %v926
        %v931 = vunpack.c.l.bf16 %v927
        %v932 = vld [vmem:[%s2] sm:$0x8]
        %v933 = vunpack.c.l.bf16 %v932
        %v934 = vlaneseq
        %v935 = vshrl.u32 %v934, 7
        %v936 = vsub.s32 6, %v935
        %v937 = vrot.slane %v933, %v936
        %v938 = vmul.f32 %v928, %v937
        %v939 = vmul.f32 %v929, %v937
        %v940 = vmul.f32 %v930, %v937
        %v941 = vmul.f32 %v931, %v937
        %v942 = vadd.f32 %v919, %v938
        %v943 = vadd.f32 %v920, %v939
        %v944 = vadd.f32 %v921, %v940
        %v945 = vadd.f32 %v922, %v941
        %s946 = scalar_lea.vmem [#allocation2], 48
        %v947 = vld [vmem:[%s946] sm:$0xf]
        %v948 = vld [vmem:[%s946 + $0x8] sm:$0xf]
        %v949 = vld [vmem:[%s946 + $0x10] sm:$0xf]
        %v950 = vld [vmem:[%s946 + $0x18] sm:$0xf]
        %v951 = vunpack.c.l.bf16 %v947
        %v952 = vunpack.c.l.bf16 %v948
        %v953 = vunpack.c.l.bf16 %v949
        %v954 = vunpack.c.l.bf16 %v950
        %v955 = vlaneseq
        %v956 = vshrl.u32 %v955, 7
        %v957 = vsub.s32 7, %v956
        %v958 = vrot.slane %v933, %v957
        %v959 = vmul.f32 %v951, %v958
        %v960 = vmul.f32 %v952, %v958
        %v961 = vmul.f32 %v953, %v958
        %v962 = vmul.f32 %v954, %v958
        %v963 = vadd.f32 %v942, %v959
        %v964 = vadd.f32 %v943, %v960
        %v965 = vadd.f32 %v944, %v961
        %v966 = vadd.f32 %v945, %v962
        %v967 = vld [vmem:[%s923 + $0x4] sm:$0x1]
        %v968 = vld [vmem:[%s923 + $0xc] sm:$0x1]
        %v969 = vld [vmem:[%s923 + $0x14] sm:$0x1]
        %v970 = vld [vmem:[%s923 + $0x1c] sm:$0x1]
        %v971 = vunpack.c.l.bf16 %v967
        %v972 = vunpack.c.l.bf16 %v968
        %v973 = vunpack.c.l.bf16 %v969
        %v974 = vunpack.c.l.bf16 %v970
        %v975 = vld [vmem:[%s2 + $0x4] sm:$0x1]
        %v976 = vunpack.c.l.bf16 %v975
        %v977 = vlaneseq
        %v978 = vshrl.u32 %v977, 7
        %v979 = vsub.s32 0, %v978
        %v980 = vrot.slane %v976, %v979
        %v981 = vmul.f32 %v928, %v980
        %v982 = vmul.f32 %v971, %v980
        %v983 = vmul.f32 %v929, %v980
        %v984 = vmul.f32 %v972, %v980
        %v985 = vmul.f32 %v930, %v980
        %v986 = vmul.f32 %v973, %v980
        %v987 = vmul.f32 %v931, %v980
        %v988 = vmul.f32 %v974, %v980
        %v997 = vrot.slane %v981, 1
        %v998 = vrot.slane %v982, 1
        %v999 = vsel %vm810, %v997, %v998
        %v1000 = vrot.slane %v983, 1
        %v1001 = vrot.slane %v984, 1
        %v1002 = vsel %vm810, %v1000, %v1001
        %v1003 = vrot.slane %v985, 1
        %v1004 = vrot.slane %v986, 1
        %v1005 = vsel %vm810, %v1003, %v1004
        %v1006 = vrot.slane %v987, 1
        %v1007 = vrot.slane %v988, 1
        %v1008 = vsel %vm810, %v1006, %v1007
        %v1013 = vadd.f32 %v963, %v999
        %v1014 = vadd.f32 %v964, %v1002
        %v1015 = vadd.f32 %v965, %v1005
        %v1016 = vadd.f32 %v966, %v1008
        %v1017 = vld [vmem:[%s3] sm:$0x1]
        %v1019 = vlaneseq
        %v1020 = vshrl.u32 %v1019, 7
        %v1021 = vsub.s32 0, %v1020
        %v1022 = vrot.slane %v1017, %v1021
        %v1024 = vadd.f32 %v1013, %v1022
        %v1025 = vadd.f32 %v1014, %v1022
        %v1026 = vadd.f32 %v1015, %v1022
        %v1027 = vadd.f32 %v1016, %v1022
        %vm1028 = vcmask 31744
        %1029 = vst.msk [vmem:[%s610] sm:$0xff] %vm1028, %v1024
        %1030 = vst.msk [vmem:[%s610 + $0x8] sm:$0xff] %vm1028, %v1025
        %1031 = vst.msk [vmem:[%s610 + $0x10] sm:$0xff] %vm1028, %v1026
        %1032 = vst.msk [vmem:[%s610 + $0x18] sm:$0xff] %vm1028, %v1027
        %s1033 = smul.u32 4, %s20
        %p1034 = scmp.lt.s32.totalorder %s19, 1
        %s1035 = scalar_select %p1034, %s19, 1
        %p1036 = scmp.lt.s32.totalorder %s1033, 7
        %s1037 = scalar_select %p1036, %s1033, 7
        %s1038 = smul.addr %s1035, 8
        %s1039 = sadd.s32 %s1037, %s1038
        %s1040 = smul.addr %s1039, 8
        %s1041 = scalar_lea.vmem %s4, %s1040
        // Predicated region
        $region140: #{_conv2d_depthwise.1} parent=130 // pred_check
          %p1042 = pneg %p145
        $region141: #{_conv2d_depthwise.1} parent=130 // pred_check_branch
          %1044 = sbr.rel (%p1042) target = $region143
        $region142: #{_conv2d_depthwise.1} parent=130 // pred_region
          %s1045 = smul.u32 4, %s20
        $region143: #{_conv2d_depthwise.1} parent=130 // pred_fallthru
          _
      $region131: #{_conv2d_depthwise.1} parent=5 // pred_fallthru
        _
      %p1046 = scmp.le.s32.totalorder 2, %s10
      // Predicated region
      $region144: #{_conv2d_depthwise.1} parent=5 // pred_check
        %p1047 = pneg %p1046
      $region145: #{_conv2d_depthwise.1} parent=5 // pred_check_branch
        %1049 = sbr.rel (%p1047) target = $region147
      $region146: #{_conv2d_depthwise.1} parent=5 // pred_region
        %s1050 = ssub.s32 %s10, 2
        // Predicated region
        $region148: #{_conv2d_depthwise.1} parent=146 // pred_check
          %p1051 = pneg %p151
        $region149: #{_conv2d_depthwise.1} parent=146 // pred_check_branch
          %1053 = sbr.rel (%p1051) target = $region151
        $region150: #{_conv2d_depthwise.1} parent=146 // pred_region
          %s1054 = smul.u32 4, %s22
          %p1055 = scmp.lt.s32.totalorder %s21, 1
          %s1056 = scalar_select %p1055, %s21, 1
          %p1057 = scmp.lt.s32.totalorder %s1054, 7
          %s1058 = scalar_select %p1057, %s1054, 7
          %s1059 = smul.addr %s1056, 8
          %s1060 = sadd.s32 %s1058, %s1059
          %s1061 = smul.addr %s1060, 8
          %s1062 = scalar_lea.vmem %s4, %s1061
        $region151: #{_conv2d_depthwise.1} parent=146 // pred_fallthru
          _
      $region147: #{_conv2d_depthwise.1} parent=5 // pred_fallthru
        _
    $region6: #{_conv2d_depthwise.1} parent=1 // loop_footer
      %s14 = sadd.s32 1, %s10
    $region7: #{_conv2d_depthwise.1} parent=1 // loop_footer_branch
      %9 = sbr.rel target = $region3
    $region8: #{_conv2d_depthwise.1} parent=1 // loop_exit
      _

</llo_original>
